<compile_context>
chip_gen: v7x
topology: tpu7x:2x2x1
jax: 0.10.0
libtpu: 0.0.40
codegen_flags: <defaults>
</compile_context>

<pallas_src>
import functools

import jax
import jax.numpy as jnp
from jax import lax
from jax.experimental import pallas as pl
from jax.experimental.pallas import tpu as pltpu

LEAKY_SLOPE = 0.01  # torch.nn.LeakyReLU default negative_slope


def _round_up(x, m):
    return ((x + m - 1) // m) * m


def _leaky_relu(x):
    return jnp.where(x > 0, x, LEAKY_SLOPE * x)


def _mlp_kernel(n_hidden, *refs):
    """Fused MLP forward on one [TB, in_p] activation tile.

    Weights are VMEM-resident across the whole grid (constant index_map,
    single-buffered); only the activation tile changes per grid step.
    Matmuls take bf16 operands with f32 accumulation; bias + LeakyReLU in f32.
    """
    if n_hidden > 0:
        (x_ref, w_in_ref, b_in_ref, w_h_ref, b_h_ref,
         w_out_ref, b_out_ref, o_ref) = refs
    else:
        (x_ref, w_in_ref, b_in_ref, w_out_ref, b_out_ref, o_ref) = refs
        w_h_ref = b_h_ref = None

    # Input layer: [TB, in_p] @ [in_p, Hp] (bf16 MXU) + [1, Hp] (f32).
    h = jnp.dot(x_ref[...], w_in_ref[...],
                preferred_element_type=jnp.float32) + b_in_ref[...]
    h = _leaky_relu(h)
    # Dropout: identity in eval mode.
    # TODO(synk): training-mode dropout (pltpu.prng_seed / prng_random_bits).

    # Hidden layers (static unroll — n_hidden is a Python int at trace time).
    for layer in range(n_hidden):
        h = jnp.dot(h.astype(jnp.bfloat16), w_h_ref[layer],
                    preferred_element_type=jnp.float32) + b_h_ref[layer]
        h = _leaky_relu(h)

    # Output layer (out_features == 1): computed as w_out @ h^T so the result
    # is a lane-dense (1, TB) row and the store is a full-lane vst.
    out = lax.dot_general(
        w_out_ref[...], h.astype(jnp.bfloat16),
        dimension_numbers=(((1,), (1,)), ((), ())),
        preferred_element_type=jnp.float32) + b_out_ref[...]
    o_ref[...] = out.astype(o_ref.dtype)


def tuneable_model_forward(x, params, n_layers, *, batch_tile=None):
    """x: [batch, input_size] float32.  Returns [batch, 1] float32."""
    w_in, b_in, w_h, b_h, w_out_row, b_out = params
    n_hidden = max(0, min(n_layers, 10) - 1)

    batch, in_size = x.shape
    hidden = w_in.shape[1]

    # ---- pad feature dims to MXU / lane-friendly multiples of 128 -----------
    # Zero padding is exact: padded inputs/weights/biases contribute nothing.
    in_p = _round_up(in_size, 128)
    h_p = _round_up(hidden, 128)

    x_p = jnp.pad(x, ((0, 0), (0, in_p - in_size)))
    w_in_p = jnp.pad(w_in, ((0, in_p - in_size), (0, h_p - hidden))).astype(jnp.bfloat16)
    b_in_p = jnp.pad(b_in, ((0, 0), (0, h_p - hidden))).astype(jnp.float32)
    w_out_p = jnp.pad(w_out_row, ((0, 0), (0, h_p - hidden))).astype(jnp.bfloat16)
    b_out_p = b_out.astype(jnp.float32)
    if n_hidden > 0:
        w_h_p = jnp.pad(w_h[:n_hidden],
                        ((0, 0), (0, h_p - hidden), (0, h_p - hidden))).astype(jnp.bfloat16)
        b_h_p = jnp.pad(b_h[:n_hidden],
                        ((0, 0), (0, 0), (0, h_p - hidden))).astype(jnp.float32)

    # ---- batch tile sized by compute ----------------------------------------
    # Bigger tiles amortize the ~0.35 us/step grid overhead for small H; tile
    # is a multiple of 128 so activation and lane-dense output blocks align.
    if batch_tile is None:
        batch_tile = 2048 if h_p <= 256 else (1024 if h_p <= 1024 else 512)
    if batch <= batch_tile:
        tb = _round_up(batch, 8)          # single tile == full (padded) batch
    else:
        tb = _round_up(batch_tile, 128)
    padded_batch = pl.cdiv(batch, tb) * tb
    if padded_batch != batch:
        x_p = jnp.pad(x_p, ((0, padded_batch - batch), (0, 0)))
    x_p = x_p.astype(jnp.bfloat16)
    grid = (padded_batch // tb,)

    kernel = functools.partial(_mlp_kernel, n_hidden)

    # Operands — the dummy hidden stack is skipped entirely when n_hidden == 0.
    operands = [x_p, w_in_p, b_in_p]
    if n_hidden > 0:
        operands += [w_h_p, b_h_p]
    operands += [w_out_p, b_out_p]

    # ---- advisory cost estimate ----------------------------------------------
    flops = 2 * padded_batch * (in_p * h_p + n_hidden * h_p * h_p + h_p)
    weight_hbm = sum(int(a.size) * a.dtype.itemsize for a in operands[1:])
    bytes_accessed = int(x_p.size) * 2 + weight_hbm + padded_batch * 4
    cost = pl.CostEstimate(flops=int(flops), transcendentals=0,
                           bytes_accessed=int(bytes_accessed))

    # ---- per-generation VMEM capacity ----------------------------------------
    try:
        cap = int(getattr(pltpu.get_tpu_info(), "vmem_capacity_bytes", 128 << 20))
    except Exception:  # pragma: no cover — keep the kernel runnable regardless
        cap = 128 << 20

    out_shape = jax.ShapeDtypeStruct((1, padded_batch), jnp.float32)
    out_spec = pl.BlockSpec((1, tb), lambda i: (0, i))

    def run(single_buffer_weights):
        buf_count = 1 if single_buffer_weights else 2
        wkw = {"pipeline_mode": pl.Buffered(1)} if single_buffer_weights else {}

        in_specs = [
            # activation tile: marches along the batch axis (double-buffered)
            pl.BlockSpec((tb, in_p), lambda i: (i, 0)),
            # weights / biases: constant block index -> VMEM-resident
            pl.BlockSpec(w_in_p.shape, lambda i: (0, 0), **wkw),
            pl.BlockSpec(b_in_p.shape, lambda i: (0, 0), **wkw),
        ]
        if n_hidden > 0:
            in_specs += [pl.BlockSpec(w_h_p.shape, lambda i: (0, 0, 0), **wkw),
                         pl.BlockSpec(b_h_p.shape, lambda i: (0, 0, 0), **wkw)]
        in_specs += [pl.BlockSpec(w_out_p.shape, lambda i: (0, 0), **wkw),
                     pl.BlockSpec(b_out_p.shape, lambda i: (0, 0), **wkw)]

        # Explicit VMEM budget: weights x buffer_count + activation double
        # buffer + output double buffer + live h intermediates + headroom.
        weight_bytes = buf_count * weight_hbm
        act_bytes = 2 * tb * in_p * 2          # x double-buffer (bf16)
        out_bytes = 2 * tb * 4                 # (1, tb) f32 output double-buffer
        live_bytes = 3 * tb * h_p * 4          # h (f32) + bf16 copy + slack
        needed = weight_bytes + act_bytes + out_bytes + live_bytes + (4 << 20)
        vmem_limit = int(min(int(cap * 0.85), max(needed, 16 << 20)))
        # TODO(synk): if bf16 weights still exceed the budget (very large
        # layer_size on v7x's 64 MiB), stream w_h per layer with an inner
        # "arbitrary" grid axis / pltpu.emit_pipeline instead of residency.

        result = pl.pallas_call(
            kernel,
            out_shape=out_shape,
            grid=grid,
            in_specs=in_specs,
            out_specs=out_spec,
            compiler_params=pltpu.CompilerParams(
                # TODO(synk): verify the batch axis shards across both v7x
                # TensorCores; switch to pltpu.CORE_PARALLEL if it does not.
                dimension_semantics=("parallel",),
                vmem_limit_bytes=vmem_limit),
            cost_estimate=cost,
        )(*operands)
        return jax.block_until_ready(result)

    try:
        out2d = run(True)       # single-buffered resident weights (half VMEM)
    except Exception:            # pl.Buffered(1) unsupported -> default buffers
        out2d = run(False)

    return out2d[0, :batch].reshape(batch, 1)


def init_params(key, input_size, layer_size, n_layers):
    """Deterministic synthetic f32 parameters (shapes match the torch module).

    Weights are stored as [in_features, out_features] (transposed vs torch) so
    the kernel computes y = x @ W + b directly on the MXU.  The output-layer
    weight is stored as a [1, layer_size] row.
    """
    n_hidden = max(0, min(n_layers, 10) - 1)
    keys = jax.random.split(key, 6)
    scale_in = 1.0 / jnp.sqrt(jnp.float32(input_size))
    scale_h = 1.0 / jnp.sqrt(jnp.float32(layer_size))

    w_in = jax.random.uniform(keys[0], (input_size, layer_size), jnp.float32,
                              -scale_in, scale_in)
    b_in = jax.random.uniform(keys[1], (1, layer_size), jnp.float32,
                              -scale_in, scale_in)
    w_h = jax.random.uniform(keys[2], (max(n_hidden, 1), layer_size, layer_size),
                             jnp.float32, -scale_h, scale_h)
    b_h = jax.random.uniform(keys[3], (max(n_hidden, 1), 1, layer_size),
                             jnp.float32, -scale_h, scale_h)
    w_out_row = jax.random.uniform(keys[4], (1, layer_size), jnp.float32,
                                   -scale_h, scale_h)
    b_out = jax.random.uniform(keys[5], (1, 1), jnp.float32, -scale_h, scale_h)
    return w_in, b_in, w_h, b_h, w_out_row, b_out


def reference_forward_f32(x, params, n_layers):
    """Pure-JAX f32 reference (matches the PyTorch module numerics)."""
    w_in, b_in, w_h, b_h, w_out_row, b_out = params
    n_hidden = max(0, min(n_layers, 10) - 1)
    h = _leaky_relu(x @ w_in + b_in)
    for layer in range(n_hidden):
        h = _leaky_relu(h @ w_h[layer] + b_h[layer])
    return h @ w_out_row.T + b_out


def reference_forward_bf16(x, params, n_layers):
    """Pure-JAX reference using the kernel's bf16-operand / f32-accumulate recipe."""
    w_in, b_in, w_h, b_h, w_out_row, b_out = params
    bf = jnp.bfloat16
    n_hidden = max(0, min(n_layers, 10) - 1)
    h = _leaky_relu(jnp.dot(x.astype(bf), w_in.astype(bf),
                            preferred_element_type=jnp.float32) + b_in)
    for layer in range(n_hidden):
        h = _leaky_relu(jnp.dot(h.astype(bf), w_h[layer].astype(bf),
                                preferred_element_type=jnp.float32) + b_h[layer])
    return jnp.dot(h.astype(bf), w_out_row.astype(bf).T,
                   preferred_element_type=jnp.float32) + b_out


if __name__ == "__main__":
    # Small, deterministic example consistent with the module's forward.
    batch = 8
    input_size = 16
    layer_size = 32       # padded to 128 internally for MXU/lane alignment
    n_layers = 4          # input_layer + linear2..linear4 + output_layer
    dropout_rate = 0.1    # identity at eval time

    key = jax.random.PRNGKey(0)
    kx, kp = jax.random.split(key)
    x = jax.random.normal(kx, (batch, input_size), jnp.float32)
    params = init_params(kp, input_size, layer_size, n_layers)

    out = tuneable_model_forward(x, params, n_layers)
    out = jax.block_until_ready(out)
    assert out.shape == (batch, 1)

    # Tight check vs a reference using the same bf16-matmul recipe, and a
    # looser check vs the pure-f32 module numerics (bf16 MXU inputs diverge).
    ref_bf = reference_forward_bf16(x, params, n_layers)
    ref_f32 = reference_forward_f32(x, params, n_layers)
    assert jnp.allclose(out, ref_bf, atol=1e-3, rtol=1e-3), \
        "mismatch vs bf16-matched reference"
    assert jnp.allclose(out, ref_f32, atol=3e-2, rtol=3e-2), \
        "mismatch vs f32 reference"

    print("KERNEL_OK")
</pallas_src>

<mosaic_0001>
module attributes {stable_mosaic.version = 11 : i64} {
  func.func @_mlp_kernel(%arg0: i32, %arg1: memref<8x128xbf16, #tpu.memory_space<vmem>>, %arg2: memref<128x128xbf16, #tpu.memory_space<vmem>>, %arg3: memref<1x128xf32, #tpu.memory_space<vmem>>, %arg4: memref<3x128x128xbf16, #tpu.memory_space<vmem>>, %arg5: memref<3x1x128xf32, #tpu.memory_space<vmem>>, %arg6: memref<1x128xbf16, #tpu.memory_space<vmem>>, %arg7: memref<1x1xf32, #tpu.memory_space<vmem>>, %arg8: memref<1x8xf32, #tpu.memory_space<vmem>>) attributes {dimension_semantics = [#tpu.dimension_semantics<parallel>], iteration_bounds = array<i64: 1>, scalar_prefetch = 0 : i64, scratch_operands = 0 : i64, tpu.core_type = #tpu.core_type<tc>, window_params = [{transform_indices = @transform_0, window_bounds = array<i64: 8, 128>}, {pipeline_mode = #tpu.pipeline_mode<synchronous>, transform_indices = @transform_1, window_bounds = array<i64: 128, 128>}, {pipeline_mode = #tpu.pipeline_mode<synchronous>, transform_indices = @transform_2, window_bounds = array<i64: 1, 128>}, {pipeline_mode = #tpu.pipeline_mode<synchronous>, transform_indices = @transform_3, window_bounds = array<i64: 3, 128, 128>}, {pipeline_mode = #tpu.pipeline_mode<synchronous>, transform_indices = @transform_4, window_bounds = array<i64: 3, 1, 128>}, {pipeline_mode = #tpu.pipeline_mode<synchronous>, transform_indices = @transform_5, window_bounds = array<i64: 1, 128>}, {pipeline_mode = #tpu.pipeline_mode<synchronous>, transform_indices = @transform_6, window_bounds = array<i64: 1, 1>}, {transform_indices = @transform_7, window_bounds = array<i64: 1, 8>}]} {
    %c0 = arith.constant 0 : index
    %c0_0 = arith.constant 0 : index
    %0 = vector.load %arg1[%c0, %c0_0] : memref<8x128xbf16, #tpu.memory_space<vmem>>, vector<8x128xbf16>
    %c0_1 = arith.constant 0 : index
    %c0_2 = arith.constant 0 : index
    %1 = vector.load %arg2[%c0_1, %c0_2] : memref<128x128xbf16, #tpu.memory_space<vmem>>, vector<128x128xbf16>
    %cst = arith.constant dense<0.000000e+00> : vector<8x128xf32>
    %2 = tpu.matmul %0, %1, %cst {dimension_numbers = #tpu.dot_dimension_numbers<[1], [0], [0], [1], [0, 0, 1, 1], [], []>} : vector<8x128xbf16>, vector<128x128xbf16>, vector<8x128xf32> -> vector<8x128xf32>
    %c0_3 = arith.constant 0 : index
    %c0_4 = arith.constant 0 : index
    %3 = vector.load %arg3[%c0_3, %c0_4] : memref<1x128xf32, #tpu.memory_space<vmem>>, vector<1x128xf32>
    %4 = vector.broadcast %3 : vector<1x128xf32> to vector<8x128xf32>
    %5 = arith.addf %2, %4 : vector<8x128xf32>
    %cst_5 = arith.constant 0.000000e+00 : f32
    %6 = vector.broadcast %cst_5 : f32 to vector<8x128xf32>
    %7 = arith.cmpf ogt, %5, %6 : vector<8x128xf32>
    %cst_6 = arith.constant 0.00999999977 : f32
    %8 = vector.broadcast %cst_6 : f32 to vector<8x128xf32>
    %9 = arith.mulf %8, %5 : vector<8x128xf32>
    %10 = arith.select %7, %5, %9 : vector<8x128xi1>, vector<8x128xf32>
    %11 = arith.truncf %10 : vector<8x128xf32> to vector<8x128xbf16>
    %c0_7 = arith.constant 0 : index
    %c0_8 = arith.constant 0 : index
    %c0_9 = arith.constant 0 : index
    %12 = vector.load %arg4[%c0_7, %c0_8, %c0_9] : memref<3x128x128xbf16, #tpu.memory_space<vmem>>, vector<1x128x128xbf16>
    %13 = vector.shape_cast %12 : vector<1x128x128xbf16> to vector<128x128xbf16>
    %cst_10 = arith.constant dense<0.000000e+00> : vector<8x128xf32>
    %14 = tpu.matmul %11, %13, %cst_10 {dimension_numbers = #tpu.dot_dimension_numbers<[1], [0], [0], [1], [0, 0, 1, 1], [], []>} : vector<8x128xbf16>, vector<128x128xbf16>, vector<8x128xf32> -> vector<8x128xf32>
    %c0_11 = arith.constant 0 : index
    %c0_12 = arith.constant 0 : index
    %c0_13 = arith.constant 0 : index
    %15 = vector.load %arg5[%c0_11, %c0_12, %c0_13] : memref<3x1x128xf32, #tpu.memory_space<vmem>>, vector<1x1x128xf32>
    %16 = vector.shape_cast %15 : vector<1x1x128xf32> to vector<1x128xf32>
    %17 = vector.broadcast %16 : vector<1x128xf32> to vector<8x128xf32>
    %18 = arith.addf %14, %17 : vector<8x128xf32>
    %cst_14 = arith.constant 0.000000e+00 : f32
    %19 = vector.broadcast %cst_14 : f32 to vector<8x128xf32>
    %20 = arith.cmpf ogt, %18, %19 : vector<8x128xf32>
    %cst_15 = arith.constant 0.00999999977 : f32
    %21 = vector.broadcast %cst_15 : f32 to vector<8x128xf32>
    %22 = arith.mulf %21, %18 : vector<8x128xf32>
    %23 = arith.select %20, %18, %22 : vector<8x128xi1>, vector<8x128xf32>
    %24 = arith.truncf %23 : vector<8x128xf32> to vector<8x128xbf16>
    %c1 = arith.constant 1 : index
    %c0_16 = arith.constant 0 : index
    %c0_17 = arith.constant 0 : index
    %25 = vector.load %arg4[%c1, %c0_16, %c0_17] : memref<3x128x128xbf16, #tpu.memory_space<vmem>>, vector<1x128x128xbf16>
    %26 = vector.shape_cast %25 : vector<1x128x128xbf16> to vector<128x128xbf16>
    %cst_18 = arith.constant dense<0.000000e+00> : vector<8x128xf32>
    %27 = tpu.matmul %24, %26, %cst_18 {dimension_numbers = #tpu.dot_dimension_numbers<[1], [0], [0], [1], [0, 0, 1, 1], [], []>} : vector<8x128xbf16>, vector<128x128xbf16>, vector<8x128xf32> -> vector<8x128xf32>
    %c1_19 = arith.constant 1 : index
    %c0_20 = arith.constant 0 : index
    %c0_21 = arith.constant 0 : index
    %28 = vector.load %arg5[%c1_19, %c0_20, %c0_21] : memref<3x1x128xf32, #tpu.memory_space<vmem>>, vector<1x1x128xf32>
    %29 = vector.shape_cast %28 : vector<1x1x128xf32> to vector<1x128xf32>
    %30 = vector.broadcast %29 : vector<1x128xf32> to vector<8x128xf32>
    %31 = arith.addf %27, %30 : vector<8x128xf32>
    %cst_22 = arith.constant 0.000000e+00 : f32
    %32 = vector.broadcast %cst_22 : f32 to vector<8x128xf32>
    %33 = arith.cmpf ogt, %31, %32 : vector<8x128xf32>
    %cst_23 = arith.constant 0.00999999977 : f32
    %34 = vector.broadcast %cst_23 : f32 to vector<8x128xf32>
    %35 = arith.mulf %34, %31 : vector<8x128xf32>
    %36 = arith.select %33, %31, %35 : vector<8x128xi1>, vector<8x128xf32>
    %37 = arith.truncf %36 : vector<8x128xf32> to vector<8x128xbf16>
    %c2 = arith.constant 2 : index
    %c0_24 = arith.constant 0 : index
    %c0_25 = arith.constant 0 : index
    %38 = vector.load %arg4[%c2, %c0_24, %c0_25] : memref<3x128x128xbf16, #tpu.memory_space<vmem>>, vector<1x128x128xbf16>
    %39 = vector.shape_cast %38 : vector<1x128x128xbf16> to vector<128x128xbf16>
    %cst_26 = arith.constant dense<0.000000e+00> : vector<8x128xf32>
    %40 = tpu.matmul %37, %39, %cst_26 {dimension_numbers = #tpu.dot_dimension_numbers<[1], [0], [0], [1], [0, 0, 1, 1], [], []>} : vector<8x128xbf16>, vector<128x128xbf16>, vector<8x128xf32> -> vector<8x128xf32>
    %c2_27 = arith.constant 2 : index
    %c0_28 = arith.constant 0 : index
    %c0_29 = arith.constant 0 : index
    %41 = vector.load %arg5[%c2_27, %c0_28, %c0_29] : memref<3x1x128xf32, #tpu.memory_space<vmem>>, vector<1x1x128xf32>
    %42 = vector.shape_cast %41 : vector<1x1x128xf32> to vector<1x128xf32>
    %43 = vector.broadcast %42 : vector<1x128xf32> to vector<8x128xf32>
    %44 = arith.addf %40, %43 : vector<8x128xf32>
    %cst_30 = arith.constant 0.000000e+00 : f32
    %45 = vector.broadcast %cst_30 : f32 to vector<8x128xf32>
    %46 = arith.cmpf ogt, %44, %45 : vector<8x128xf32>
    %cst_31 = arith.constant 0.00999999977 : f32
    %47 = vector.broadcast %cst_31 : f32 to vector<8x128xf32>
    %48 = arith.mulf %47, %44 : vector<8x128xf32>
    %49 = arith.select %46, %44, %48 : vector<8x128xi1>, vector<8x128xf32>
    %c0_32 = arith.constant 0 : index
    %c0_33 = arith.constant 0 : index
    %50 = vector.load %arg6[%c0_32, %c0_33] : memref<1x128xbf16, #tpu.memory_space<vmem>>, vector<1x128xbf16>
    %51 = arith.truncf %49 : vector<8x128xf32> to vector<8x128xbf16>
    %cst_34 = arith.constant dense<0.000000e+00> : vector<1x8xf32>
    %52 = tpu.matmul %50, %51, %cst_34 {dimension_numbers = #tpu.dot_dimension_numbers<[1], [1], [0], [0], [0, 0, 1, 0], [], []>} : vector<1x128xbf16>, vector<8x128xbf16>, vector<1x8xf32> -> vector<1x8xf32>
    %c0_35 = arith.constant 0 : index
    %c0_36 = arith.constant 0 : index
    %53 = vector.load %arg7[%c0_35, %c0_36] : memref<1x1xf32, #tpu.memory_space<vmem>>, vector<1x1xf32>
    %54 = vector.broadcast %53 : vector<1x1xf32> to vector<1x8xf32>
    %55 = arith.addf %52, %54 : vector<1x8xf32>
    %c0_37 = arith.constant 0 : index
    %c0_38 = arith.constant 0 : index
    %56 = vector.load %arg8[%c0_37, %c0_38] : memref<1x8xf32, #tpu.memory_space<vmem>>, vector<1x8xf32>
    tpu.vector_store %arg8[%c0_37, %c0_38], %55 {strides = array<i32>} : memref<1x8xf32, #tpu.memory_space<vmem>>, vector<1x8xf32>,
    return
  }
  func.func @transform_0(%arg0: i32) -> (i32, i32) {
    %c0_i32 = arith.constant 0 : i32
    %c0_i32_0 = arith.constant 0 : i32
    return %arg0, %c0_i32 : i32, i32
  }
  func.func @transform_1(%arg0: i32) -> (i32, i32) {
    %c0_i32 = arith.constant 0 : i32
    %c0_i32_0 = arith.constant 0 : i32
    %c0_i32_1 = arith.constant 0 : i32
    return %c0_i32, %c0_i32_0 : i32, i32
  }
  func.func @transform_2(%arg0: i32) -> (i32, i32) {
    %c0_i32 = arith.constant 0 : i32
    %c0_i32_0 = arith.constant 0 : i32
    %c0_i32_1 = arith.constant 0 : i32
    return %c0_i32, %c0_i32_0 : i32, i32
  }
  func.func @transform_3(%arg0: i32) -> (i32, i32, i32) {
    %c0_i32 = arith.constant 0 : i32
    %c0_i32_0 = arith.constant 0 : i32
    %c0_i32_1 = arith.constant 0 : i32
    %c0_i32_2 = arith.constant 0 : i32
    return %c0_i32, %c0_i32_0, %c0_i32_1 : i32, i32, i32
  }
  func.func @transform_4(%arg0: i32) -> (i32, i32, i32) {
    %c0_i32 = arith.constant 0 : i32
    %c0_i32_0 = arith.constant 0 : i32
    %c0_i32_1 = arith.constant 0 : i32
    %c0_i32_2 = arith.constant 0 : i32
    return %c0_i32, %c0_i32_0, %c0_i32_1 : i32, i32, i32
  }
  func.func @transform_5(%arg0: i32) -> (i32, i32) {
    %c0_i32 = arith.constant 0 : i32
    %c0_i32_0 = arith.constant 0 : i32
    %c0_i32_1 = arith.constant 0 : i32
    return %c0_i32, %c0_i32_0 : i32, i32
  }
  func.func @transform_6(%arg0: i32) -> (i32, i32) {
    %c0_i32 = arith.constant 0 : i32
    %c0_i32_0 = arith.constant 0 : i32
    %c0_i32_1 = arith.constant 0 : i32
    return %c0_i32, %c0_i32_0 : i32, i32
  }
  func.func @transform_7(%arg0: i32) -> (i32, i32) {
    %c0_i32 = arith.constant 0 : i32
    %c0_i32_0 = arith.constant 0 : i32
    return %c0_i32, %arg0 : i32, i32
  }
}

module attributes {stable_mosaic.version = 11 : i64} {
  func.func @_mlp_kernel(%arg0: i32, %arg1: memref<8x128xbf16, #tpu.memory_space<vmem>>, %arg2: memref<128x128xbf16, #tpu.memory_space<vmem>>, %arg3: memref<1x128xf32, #tpu.memory_space<vmem>>, %arg4: memref<3x128x128xbf16, #tpu.memory_space<vmem>>, %arg5: memref<3x1x128xf32, #tpu.memory_space<vmem>>, %arg6: memref<1x128xbf16, #tpu.memory_space<vmem>>, %arg7: memref<1x1xf32, #tpu.memory_space<vmem>>, %arg8: memref<1x8xf32, #tpu.memory_space<vmem>>) attributes {dimension_semantics = [#tpu.dimension_semantics<parallel>], iteration_bounds = array<i64: 1>, scalar_prefetch = 0 : i64, scratch_operands = 0 : i64, tpu.core_type = #tpu.core_type<tc>, window_params = [{transform_indices = @transform_0, window_bounds = array<i64: 8, 128>}, {pipeline_mode = #tpu.pipeline_mode<synchronous>, transform_indices = @transform_1, window_bounds = array<i64: 128, 128>}, {pipeline_mode = #tpu.pipeline_mode<synchronous>, transform_indices = @transform_2, window_bounds = array<i64: 1, 128>}, {pipeline_mode = #tpu.pipeline_mode<synchronous>, transform_indices = @transform_3, window_bounds = array<i64: 3, 128, 128>}, {pipeline_mode = #tpu.pipeline_mode<synchronous>, transform_indices = @transform_4, window_bounds = array<i64: 3, 1, 128>}, {pipeline_mode = #tpu.pipeline_mode<synchronous>, transform_indices = @transform_5, window_bounds = array<i64: 1, 128>}, {pipeline_mode = #tpu.pipeline_mode<synchronous>, transform_indices = @transform_6, window_bounds = array<i64: 1, 1>}, {transform_indices = @transform_7, window_bounds = array<i64: 1, 8>}]} {
    %c0 = arith.constant 0 : index
    %c0_0 = arith.constant 0 : index
    %0 = vector.load %arg1[%c0, %c0_0] : memref<8x128xbf16, #tpu.memory_space<vmem>>, vector<8x128xbf16>
    %c0_1 = arith.constant 0 : index
    %c0_2 = arith.constant 0 : index
    %1 = vector.load %arg2[%c0_1, %c0_2] : memref<128x128xbf16, #tpu.memory_space<vmem>>, vector<128x128xbf16>
    %cst = arith.constant dense<0.000000e+00> : vector<8x128xf32>
    %2 = tpu.matmul %0, %1, %cst {dimension_numbers = #tpu.dot_dimension_numbers<[1], [0], [0], [1], [0, 0, 1, 1], [], []>} : vector<8x128xbf16>, vector<128x128xbf16>, vector<8x128xf32> -> vector<8x128xf32>
    %c0_3 = arith.constant 0 : index
    %c0_4 = arith.constant 0 : index
    %3 = vector.load %arg3[%c0_3, %c0_4] : memref<1x128xf32, #tpu.memory_space<vmem>>, vector<1x128xf32>
    %4 = vector.broadcast %3 : vector<1x128xf32> to vector<8x128xf32>
    %5 = arith.addf %2, %4 : vector<8x128xf32>
    %cst_5 = arith.constant 0.000000e+00 : f32
    %6 = vector.broadcast %cst_5 : f32 to vector<8x128xf32>
    %7 = arith.cmpf ogt, %5, %6 : vector<8x128xf32>
    %cst_6 = arith.constant 0.00999999977 : f32
    %8 = vector.broadcast %cst_6 : f32 to vector<8x128xf32>
    %9 = arith.mulf %8, %5 : vector<8x128xf32>
    %10 = arith.select %7, %5, %9 : vector<8x128xi1>, vector<8x128xf32>
    %11 = arith.truncf %10 : vector<8x128xf32> to vector<8x128xbf16>
    %c0_7 = arith.constant 0 : index
    %c0_8 = arith.constant 0 : index
    %c0_9 = arith.constant 0 : index
    %12 = vector.load %arg4[%c0_7, %c0_8, %c0_9] : memref<3x128x128xbf16, #tpu.memory_space<vmem>>, vector<1x128x128xbf16>
    %13 = vector.shape_cast %12 : vector<1x128x128xbf16> to vector<128x128xbf16>
    %cst_10 = arith.constant dense<0.000000e+00> : vector<8x128xf32>
    %14 = tpu.matmul %11, %13, %cst_10 {dimension_numbers = #tpu.dot_dimension_numbers<[1], [0], [0], [1], [0, 0, 1, 1], [], []>} : vector<8x128xbf16>, vector<128x128xbf16>, vector<8x128xf32> -> vector<8x128xf32>
    %c0_11 = arith.constant 0 : index
    %c0_12 = arith.constant 0 : index
    %c0_13 = arith.constant 0 : index
    %15 = vector.load %arg5[%c0_11, %c0_12, %c0_13] : memref<3x1x128xf32, #tpu.memory_space<vmem>>, vector<1x1x128xf32>
    %16 = vector.shape_cast %15 : vector<1x1x128xf32> to vector<1x128xf32>
    %17 = vector.broadcast %16 : vector<1x128xf32> to vector<8x128xf32>
    %18 = arith.addf %14, %17 : vector<8x128xf32>
    %cst_14 = arith.constant 0.000000e+00 : f32
    %19 = vector.broadcast %cst_14 : f32 to vector<8x128xf32>
    %20 = arith.cmpf ogt, %18, %19 : vector<8x128xf32>
    %cst_15 = arith.constant 0.00999999977 : f32
    %21 = vector.broadcast %cst_15 : f32 to vector<8x128xf32>
    %22 = arith.mulf %21, %18 : vector<8x128xf32>
    %23 = arith.select %20, %18, %22 : vector<8x128xi1>, vector<8x128xf32>
    %24 = arith.truncf %23 : vector<8x128xf32> to vector<8x128xbf16>
    %c1 = arith.constant 1 : index
    %c0_16 = arith.constant 0 : index
    %c0_17 = arith.constant 0 : index
    %25 = vector.load %arg4[%c1, %c0_16, %c0_17] : memref<3x128x128xbf16, #tpu.memory_space<vmem>>, vector<1x128x128xbf16>
    %26 = vector.shape_cast %25 : vector<1x128x128xbf16> to vector<128x128xbf16>
    %cst_18 = arith.constant dense<0.000000e+00> : vector<8x128xf32>
    %27 = tpu.matmul %24, %26, %cst_18 {dimension_numbers = #tpu.dot_dimension_numbers<[1], [0], [0], [1], [0, 0, 1, 1], [], []>} : vector<8x128xbf16>, vector<128x128xbf16>, vector<8x128xf32> -> vector<8x128xf32>
    %c1_19 = arith.constant 1 : index
    %c0_20 = arith.constant 0 : index
    %c0_21 = arith.constant 0 : index
    %28 = vector.load %arg5[%c1_19, %c0_20, %c0_21] : memref<3x1x128xf32, #tpu.memory_space<vmem>>, vector<1x1x128xf32>
    %29 = vector.shape_cast %28 : vector<1x1x128xf32> to vector<1x128xf32>
    %30 = vector.broadcast %29 : vector<1x128xf32> to vector<8x128xf32>
    %31 = arith.addf %27, %30 : vector<8x128xf32>
    %cst_22 = arith.constant 0.000000e+00 : f32
    %32 = vector.broadcast %cst_22 : f32 to vector<8x128xf32>
    %33 = arith.cmpf ogt, %31, %32 : vector<8x128xf32>
    %cst_23 = arith.constant 0.00999999977 : f32
    %34 = vector.broadcast %cst_23 : f32 to vector<8x128xf32>
    %35 = arith.mulf %34, %31 : vector<8x128xf32>
    %36 = arith.select %33, %31, %35 : vector<8x128xi1>, vector<8x128xf32>
    %37 = arith.truncf %36 : vector<8x128xf32> to vector<8x128xbf16>
    %c2 = arith.constant 2 : index
    %c0_24 = arith.constant 0 : index
    %c0_25 = arith.constant 0 : index
    %38 = vector.load %arg4[%c2, %c0_24, %c0_25] : memref<3x128x128xbf16, #tpu.memory_space<vmem>>, vector<1x128x128xbf16>
    %39 = vector.shape_cast %38 : vector<1x128x128xbf16> to vector<128x128xbf16>
    %cst_26 = arith.constant dense<0.000000e+00> : vector<8x128xf32>
    %40 = tpu.matmul %37, %39, %cst_26 {dimension_numbers = #tpu.dot_dimension_numbers<[1], [0], [0], [1], [0, 0, 1, 1], [], []>} : vector<8x128xbf16>, vector<128x128xbf16>, vector<8x128xf32> -> vector<8x128xf32>
    %c2_27 = arith.constant 2 : index
    %c0_28 = arith.constant 0 : index
    %c0_29 = arith.constant 0 : index
    %41 = vector.load %arg5[%c2_27, %c0_28, %c0_29] : memref<3x1x128xf32, #tpu.memory_space<vmem>>, vector<1x1x128xf32>
    %42 = vector.shape_cast %41 : vector<1x1x128xf32> to vector<1x128xf32>
    %43 = vector.broadcast %42 : vector<1x128xf32> to vector<8x128xf32>
    %44 = arith.addf %40, %43 : vector<8x128xf32>
    %cst_30 = arith.constant 0.000000e+00 : f32
    %45 = vector.broadcast %cst_30 : f32 to vector<8x128xf32>
    %46 = arith.cmpf ogt, %44, %45 : vector<8x128xf32>
    %cst_31 = arith.constant 0.00999999977 : f32
    %47 = vector.broadcast %cst_31 : f32 to vector<8x128xf32>
    %48 = arith.mulf %47, %44 : vector<8x128xf32>
    %49 = arith.select %46, %44, %48 : vector<8x128xi1>, vector<8x128xf32>
    %c0_32 = arith.constant 0 : index
    %c0_33 = arith.constant 0 : index
    %50 = vector.load %arg6[%c0_32, %c0_33] : memref<1x128xbf16, #tpu.memory_space<vmem>>, vector<1x128xbf16>
    %51 = arith.truncf %49 : vector<8x128xf32> to vector<8x128xbf16>
    %cst_34 = arith.constant dense<0.000000e+00> : vector<1x8xf32>
    %52 = tpu.matmul %50, %51, %cst_34 {dimension_numbers = #tpu.dot_dimension_numbers<[1], [1], [0], [0], [0, 0, 1, 0], [], []>} : vector<1x128xbf16>, vector<8x128xbf16>, vector<1x8xf32> -> vector<1x8xf32>
    %c0_35 = arith.constant 0 : index
    %c0_36 = arith.constant 0 : index
    %53 = vector.load %arg7[%c0_35, %c0_36] : memref<1x1xf32, #tpu.memory_space<vmem>>, vector<1x1xf32>
    %54 = vector.broadcast %53 : vector<1x1xf32> to vector<1x8xf32>
    %55 = arith.addf %52, %54 : vector<1x8xf32>
    %c0_37 = arith.constant 0 : index
    %c0_38 = arith.constant 0 : index
    %56 = vector.load %arg8[%c0_37, %c0_38] : memref<1x8xf32, #tpu.memory_space<vmem>>, vector<1x8xf32>
    tpu.vector_store %arg8[%c0_37, %c0_38], %55 {strides = array<i32>} : memref<1x8xf32, #tpu.memory_space<vmem>>, vector<1x8xf32>,
    return
  }
  func.func @transform_0(%arg0: i32) -> (i32, i32) {
    %c0_i32 = arith.constant 0 : i32
    %c0_i32_0 = arith.constant 0 : i32
    return %arg0, %c0_i32 : i32, i32
  }
  func.func @transform_1(%arg0: i32) -> (i32, i32) {
    %c0_i32 = arith.constant 0 : i32
    %c0_i32_0 = arith.constant 0 : i32
    %c0_i32_1 = arith.constant 0 : i32
    return %c0_i32, %c0_i32_0 : i32, i32
  }
  func.func @transform_2(%arg0: i32) -> (i32, i32) {
    %c0_i32 = arith.constant 0 : i32
    %c0_i32_0 = arith.constant 0 : i32
    %c0_i32_1 = arith.constant 0 : i32
    return %c0_i32, %c0_i32_0 : i32, i32
  }
  func.func @transform_3(%arg0: i32) -> (i32, i32, i32) {
    %c0_i32 = arith.constant 0 : i32
    %c0_i32_0 = arith.constant 0 : i32
    %c0_i32_1 = arith.constant 0 : i32
    %c0_i32_2 = arith.constant 0 : i32
    return %c0_i32, %c0_i32_0, %c0_i32_1 : i32, i32, i32
  }
  func.func @transform_4(%arg0: i32) -> (i32, i32, i32) {
    %c0_i32 = arith.constant 0 : i32
    %c0_i32_0 = arith.constant 0 : i32
    %c0_i32_1 = arith.constant 0 : i32
    %c0_i32_2 = arith.constant 0 : i32
    return %c0_i32, %c0_i32_0, %c0_i32_1 : i32, i32, i32
  }
  func.func @transform_5(%arg0: i32) -> (i32, i32) {
    %c0_i32 = arith.constant 0 : i32
    %c0_i32_0 = arith.constant 0 : i32
    %c0_i32_1 = arith.constant 0 : i32
    return %c0_i32, %c0_i32_0 : i32, i32
  }
  func.func @transform_6(%arg0: i32) -> (i32, i32) {
    %c0_i32 = arith.constant 0 : i32
    %c0_i32_0 = arith.constant 0 : i32
    %c0_i32_1 = arith.constant 0 : i32
    return %c0_i32, %c0_i32_0 : i32, i32
  }
  func.func @transform_7(%arg0: i32) -> (i32, i32) {
    %c0_i32 = arith.constant 0 : i32
    %c0_i32_0 = arith.constant 0 : i32
    return %c0_i32, %arg0 : i32, i32
  }
}

</mosaic_0001>

<llo_original>
// kernel: tpu_custom_call.1
$region0: #{tpu_custom_call.1}
  #allocation0 [shape = 'u32[]', space=smem, size = 0x4, offset = 0x4, fixed_abs, tag = 'smem constant byte address 0x4 - core index']
  #allocation1 [shape = 'u32[144,128]{1,0:T(1,128)}', space=vmem, size = 0x12000, scoped, tag = 'internal scratch']
  #allocation2 [shape = 'f32[1,1]{1,0:T(1,128)S(1)}', space=vmem, size = 0x200, scoped, tag = 'scoped memory for tpu_custom_call.1']
  %s0 = inlined_call_operand.hbm [shape: bf16[8,128], index: 0, kind: input, shape index: {}]
  %s1 = inlined_call_operand.hbm [shape: bf16[128,128], index: 1, kind: input, shape index: {}]
  %s2 = inlined_call_operand.vmem [shape: f32[1,128], index: 2, kind: input, shape index: {}]
  %s3 = inlined_call_operand.hbm [shape: bf16[3,128,128], index: 3, kind: input, shape index: {}]
  %s4 = inlined_call_operand.vmem [shape: f32[3,1,128], index: 4, kind: input, shape index: {}]
  %s5 = inlined_call_operand.vmem [shape: bf16[1,128], index: 5, kind: input, shape index: {}]
  %s6 = inlined_call_operand.<no memory space> [shape: f32[1,1], index: 6, kind: input, shape index: {}]
  %s7 = inlined_call_operand.hbm [shape: f32[1,8], index: 7, kind: output, shape index: {}]
  %s8 = sld [smem:[#allocation0]]
  $region50: #{tpu_custom_call.1} parent=0
    _
  %s10 = ssub.s32 1, %s8
  %s11 = scalar_select 0, %s10, %s8
  %v12 = vstv %s6
  %13 = vst [vmem:[#allocation2] sm:$0x1] %v12
  $region1: #{tpu_custom_call.1} parent=0
    #allocation3 [shape = 'u8[2048]{0}', space=vmem, size = 0x800, scoped, tag = 'input window, operand 0, single buffered']
    #allocation4 [shape = 's32[1]{0}', space=sflag, size = 0x4, scoped, tag = 'scoped memory for tpu_custom_call.1']
    #allocation5 [shape = 's32[1]{0}', space=sflag, size = 0x4, scoped, tag = 'scoped memory for tpu_custom_call.1']
    #allocation6 [shape = 'u8[32768]{0}', space=vmem, size = 0x8000, scoped, tag = 'input window, operand 1, single buffered']
    #allocation7 [shape = 's32[1]{0}', space=sflag, size = 0x4, scoped, tag = 'scoped memory for tpu_custom_call.1']
    #allocation8 [shape = 'u8[98304]{0}', space=vmem, size = 0x18000, scoped, tag = 'input window, operand 3, single buffered']
    #allocation9 [shape = 'u8[512]{0}', space=vmem, size = 0x400, scoped, tag = 'output window, operand 0, single buffered']
    %14 = vsyncpa [#allocation4], 0
    %15 = vsyncpa [#allocation7], 0
    %16 = vsyncpa [#allocation5], 0
    // Predicated region
    $region2: #{tpu_custom_call.1} parent=1 // pred_check
      _
    $region3: #{tpu_custom_call.1} parent=1 // pred_check_branch
      %18 = sbr.rel (0) target = $region5
    $region4: #{tpu_custom_call.1} parent=1 // pred_region
      %s20 = ssub.s32 64, 64
      %21 = vsyncadd [#allocation4], %s20
      %s23 = sshll.u32 [#allocation3], 4
      %s24 = int_to_ptr.vmem [resolvable:$true] %s23
      %26 = dma.hbm_to_vmem [thread:$0]  %s0, 64, %s24, [#allocation4]
    $region5: #{tpu_custom_call.1} parent=1 // pred_fallthru
      _
    // Predicated region
    $region6: #{tpu_custom_call.1} parent=1 // pred_check
      _
    $region7: #{tpu_custom_call.1} parent=1 // pred_check_branch
      %28 = sbr.rel (0) target = $region9
    $region8: #{tpu_custom_call.1} parent=1 // pred_region
      %s30 = ssub.s32 1024, 1024
      %31 = vsyncadd [#allocation7], %s30
      %s32 = sshll.u32 [#allocation6], 4
      %s33 = int_to_ptr.vmem [resolvable:$true] %s32
      %38 = dma.hbm_to_vmem [thread:$0]  %s1, 1024, %s33, [#allocation7], 64, 64, 4
    $region9: #{tpu_custom_call.1} parent=1 // pred_fallthru
      _
    // Predicated region
    $region10: #{tpu_custom_call.1} parent=1 // pred_check
      _
    $region11: #{tpu_custom_call.1} parent=1 // pred_check_branch
      %40 = sbr.rel (0) target = $region13
    $region12: #{tpu_custom_call.1} parent=1 // pred_region
      _
    $region13: #{tpu_custom_call.1} parent=1 // pred_fallthru
      _
    // Predicated region
    $region14: #{tpu_custom_call.1} parent=1 // pred_check
      _
    $region15: #{tpu_custom_call.1} parent=1 // pred_check_branch
      %42 = sbr.rel (0) target = $region17
    $region16: #{tpu_custom_call.1} parent=1 // pred_region
      %s44 = ssub.s32 3072, 3072
      %45 = vsyncadd [#allocation7], %s44
      %s46 = sshll.u32 [#allocation8], 4
      %s47 = int_to_ptr.vmem [resolvable:$true] %s46
      %52 = dma.hbm_to_vmem [thread:$0]  %s3, 3072, %s47, [#allocation7], 64, 64, 4
    $region17: #{tpu_custom_call.1} parent=1 // pred_fallthru
      _
    // Predicated region
    $region18: #{tpu_custom_call.1} parent=1 // pred_check
      _
    $region19: #{tpu_custom_call.1} parent=1 // pred_check_branch
      %54 = sbr.rel (0) target = $region21
    $region20: #{tpu_custom_call.1} parent=1 // pred_region
      _
    $region21: #{tpu_custom_call.1} parent=1 // pred_fallthru
      _
    // Predicated region
    $region22: #{tpu_custom_call.1} parent=1 // pred_check
      _
    $region23: #{tpu_custom_call.1} parent=1 // pred_check_branch
      %56 = sbr.rel (0) target = $region25
    $region24: #{tpu_custom_call.1} parent=1 // pred_region
      _
    $region25: #{tpu_custom_call.1} parent=1 // pred_fallthru
      _
    // Predicated region
    $region26: #{tpu_custom_call.1} parent=1 // pred_check
      _
    $region27: #{tpu_custom_call.1} parent=1 // pred_check_branch
      %58 = sbr.rel (0) target = $region29
    $region28: #{tpu_custom_call.1} parent=1 // pred_region
      _
    $region29: #{tpu_custom_call.1} parent=1 // pred_fallthru
      _
    // Predicated region
    $region30: #{tpu_custom_call.1} parent=1 // pred_check
      _
    $region31: #{tpu_custom_call.1} parent=1 // pred_check_branch
      %60 = sbr.rel (0) target = $region33
    $region32: #{tpu_custom_call.1} parent=1 // pred_region
      %61 = dma.done [#allocation4], 64
    $region33: #{tpu_custom_call.1} parent=1 // pred_fallthru
      _
    // Predicated region
    $region34: #{tpu_custom_call.1} parent=1 // pred_check
      _
    $region35: #{tpu_custom_call.1} parent=1 // pred_check_branch
      %63 = sbr.rel (0) target = $region37
    $region36: #{tpu_custom_call.1} parent=1 // pred_region
      %64 = dma.done [#allocation7], 1024
    $region37: #{tpu_custom_call.1} parent=1 // pred_fallthru
      _
    // Predicated region
    $region38: #{tpu_custom_call.1} parent=1 // pred_check
      _
    $region39: #{tpu_custom_call.1} parent=1 // pred_check_branch
      %66 = sbr.rel (0) target = $region41
    $region40: #{tpu_custom_call.1} parent=1 // pred_region
      %67 = dma.done [#allocation7], 3072
    $region41: #{tpu_custom_call.1} parent=1 // pred_fallthru
      _
    %v69 = vld [vmem:[#allocation3] sm:$0xf]
    %v70 = vld [vmem:[#allocation6] sm:$0xf]
    %v71 = vld [vmem:[#allocation6 + $0x4] sm:$0xf]
    %v72 = vld [vmem:[#allocation6 + $0x8] sm:$0xf]
    %v73 = vld [vmem:[#allocation6 + $0xc] sm:$0xf]
    %v74 = vld [vmem:[#allocation6 + $0x10] sm:$0xf]
    %v75 = vld [vmem:[#allocation6 + $0x14] sm:$0xf]
    %v76 = vld [vmem:[#allocation6 + $0x18] sm:$0xf]
    %v77 = vld [vmem:[#allocation6 + $0x1c] sm:$0xf]
    %v78 = vld [vmem:[#allocation6 + $0x20] sm:$0xf]
    %v79 = vld [vmem:[#allocation6 + $0x24] sm:$0xf]
    %v80 = vld [vmem:[#allocation6 + $0x28] sm:$0xf]
    %v81 = vld [vmem:[#allocation6 + $0x2c] sm:$0xf]
    %v82 = vld [vmem:[#allocation6 + $0x30] sm:$0xf]
    %v83 = vld [vmem:[#allocation6 + $0x34] sm:$0xf]
    %v84 = vld [vmem:[#allocation6 + $0x38] sm:$0xf]
    %v85 = vld [vmem:[#allocation6 + $0x3c] sm:$0xf]
    %v86 = vld [vmem:[%s2] sm:$0x1]
    %v88 = vlaneseq
    %v89 = vshrl.u32 %v88, 7
    %v90 = vsub.s32 0, %v89
    %v91 = vrot.slane %v86, %v90
    %v109 = vunpack.c.l.b16 %v70
    %v110 = vunpack.c.l.b16 %v71
    %v111 = vunpack.c.l.b16 %v72
    %v112 = vunpack.c.l.b16 %v73
    %v113 = vunpack.c.l.b16 %v74
    %v114 = vunpack.c.l.b16 %v75
    %v115 = vunpack.c.l.b16 %v76
    %v116 = vunpack.c.l.b16 %v77
    %v117 = vunpack.c.l.b16 %v78
    %v118 = vunpack.c.l.b16 %v79
    %v119 = vunpack.c.l.b16 %v80
    %v120 = vunpack.c.l.b16 %v81
    %v121 = vunpack.c.l.b16 %v82
    %v122 = vunpack.c.l.b16 %v83
    %v123 = vunpack.c.l.b16 %v84
    %v124 = vunpack.c.l.b16 %v85
    %v125 = vpack.c.b16 %v110, %v109
    %v126 = vpack.c.b16 %v112, %v111
    %v127 = vpack.c.b16 %v114, %v113
    %v128 = vpack.c.b16 %v116, %v115
    %v129 = vpack.c.b16 %v118, %v117
    %v130 = vpack.c.b16 %v120, %v119
    %v131 = vpack.c.b16 %v122, %v121
    %v132 = vpack.c.b16 %v124, %v123
    %141 = vmatprep.subr.bf16.mxu0 0
    %142 = vmatpush1.bf16.msra.mxu0 %v125
    %143 = vmatprep.subr.bf16.mxu0 0
    %144 = vmatpush1.bf16.msra.mxu0 %v126
    %145 = vmatprep.subr.bf16.mxu0 0
    %146 = vmatpush1.bf16.msra.mxu0 %v127
    %147 = vmatprep.subr.bf16.mxu0 0
    %148 = vmatpush1.bf16.msra.mxu0 %v128
    %149 = vmatprep.subr.bf16.mxu0 0
    %150 = vmatpush1.bf16.msra.mxu0 %v129
    %151 = vmatprep.subr.bf16.mxu0 0
    %152 = vmatpush1.bf16.msra.mxu0 %v130
    %153 = vmatprep.subr.bf16.mxu0 0
    %154 = vmatpush1.bf16.msra.mxu0 %v131
    %155 = vmatprep.subr.bf16.mxu0 0
    %156 = vmatpush1.bf16.msra.mxu0 %v132
    %157 = vmatprep.subr.bf16.mxu0 0
    %158 = vmatpush1.bf16.msra.mxu0 0
    %159 = vmatprep.subr.bf16.mxu0 0
    %160 = vmatpush1.bf16.msra.mxu0 0
    %161 = vmatprep.subr.bf16.mxu0 0
    %162 = vmatpush1.bf16.msra.mxu0 0
    %163 = vmatprep.subr.bf16.mxu0 0
    %164 = vmatpush1.bf16.msra.mxu0 0
    %165 = vmatprep.subr.bf16.mxu0 0
    %166 = vmatpush1.bf16.msra.mxu0 0
    %167 = vmatprep.subr.bf16.mxu0 0
    %168 = vmatpush1.bf16.msra.mxu0 0
    %169 = vmatprep.subr.bf16.mxu0 0
    %170 = vmatpush1.bf16.msra.mxu0 0
    %171 = vmatprep.subr.bf16.mxu0 0
    %172 = vmatpush1.bf16.msra.mxu0 0
    %173 = vmatprep.mubr.bf16.mxu0 0
    %174 = vmatmul.mubr.bf16.gmra.mrb[0].mxu0 %v69
    %v175 = vpop.f32.mrb[0].mxu0
    %v176 = vadd.f32 %v91, %v175
    %v177 = vpop.f32.mrb[0].mxu0
    %v178 = vpop.f32.mrb[0].mxu0
    %v179 = vpop.f32.mrb[0].mxu0
    %180 = vdwg.mxu0
    %vm181 = vcmp.gt.f32.partialorder %v176, 0.0
    %v182 = vmul.f32 %v176, 0.01
    %v183 = vsel %vm181, %v176, %v182
    %v184 = vpack.c.bf16 %v183, %v183
    %v185 = vld [vmem:[#allocation8] sm:$0xf]
    %v186 = vld [vmem:[#allocation8 + $0x4] sm:$0xf]
    %v187 = vld [vmem:[#allocation8 + $0x8] sm:$0xf]
    %v188 = vld [vmem:[#allocation8 + $0xc] sm:$0xf]
    %v189 = vld [vmem:[#allocation8 + $0x10] sm:$0xf]
    %v190 = vld [vmem:[#allocation8 + $0x14] sm:$0xf]
    %v191 = vld [vmem:[#allocation8 + $0x18] sm:$0xf]
    %v192 = vld [vmem:[#allocation8 + $0x1c] sm:$0xf]
    %v193 = vld [vmem:[#allocation8 + $0x20] sm:$0xf]
    %v194 = vld [vmem:[#allocation8 + $0x24] sm:$0xf]
    %v195 = vld [vmem:[#allocation8 + $0x28] sm:$0xf]
    %v196 = vld [vmem:[#allocation8 + $0x2c] sm:$0xf]
    %v197 = vld [vmem:[#allocation8 + $0x30] sm:$0xf]
    %v198 = vld [vmem:[#allocation8 + $0x34] sm:$0xf]
    %v199 = vld [vmem:[#allocation8 + $0x38] sm:$0xf]
    %v200 = vld [vmem:[#allocation8 + $0x3c] sm:$0xf]
    %v201 = vld [vmem:[%s4] sm:$0x1]
    %v203 = vlaneseq
    %v204 = vshrl.u32 %v203, 7
    %v205 = vsub.s32 0, %v204
    %v206 = vrot.slane %v201, %v205
    %v224 = vunpack.c.l.b16 %v185
    %v225 = vunpack.c.l.b16 %v186
    %v226 = vunpack.c.l.b16 %v187
    %v227 = vunpack.c.l.b16 %v188
    %v228 = vunpack.c.l.b16 %v189
    %v229 = vunpack.c.l.b16 %v190
    %v230 = vunpack.c.l.b16 %v191
    %v231 = vunpack.c.l.b16 %v192
    %v232 = vunpack.c.l.b16 %v193
    %v233 = vunpack.c.l.b16 %v194
    %v234 = vunpack.c.l.b16 %v195
    %v235 = vunpack.c.l.b16 %v196
    %v236 = vunpack.c.l.b16 %v197
    %v237 = vunpack.c.l.b16 %v198
    %v238 = vunpack.c.l.b16 %v199
    %v239 = vunpack.c.l.b16 %v200
    %v240 = vpack.c.b16 %v225, %v224
    %v241 = vpack.c.b16 %v227, %v226
    %v242 = vpack.c.b16 %v229, %v228
    %v243 = vpack.c.b16 %v231, %v230
    %v244 = vpack.c.b16 %v233, %v232
    %v245 = vpack.c.b16 %v235, %v234
    %v246 = vpack.c.b16 %v237, %v236
    %v247 = vpack.c.b16 %v239, %v238
    %256 = vmatprep.subr.bf16.mxu0 0
    %257 = vmatpush1.bf16.msra.mxu0 %v240
    %258 = vmatprep.subr.bf16.mxu0 0
    %259 = vmatpush1.bf16.msra.mxu0 %v241
    %260 = vmatprep.subr.bf16.mxu0 0
    %261 = vmatpush1.bf16.msra.mxu0 %v242
    %262 = vmatprep.subr.bf16.mxu0 0
    %263 = vmatpush1.bf16.msra.mxu0 %v243
    %264 = vmatprep.subr.bf16.mxu0 0
    %265 = vmatpush1.bf16.msra.mxu0 %v244
    %266 = vmatprep.subr.bf16.mxu0 0
    %267 = vmatpush1.bf16.msra.mxu0 %v245
    %268 = vmatprep.subr.bf16.mxu0 0
    %269 = vmatpush1.bf16.msra.mxu0 %v246
    %270 = vmatprep.subr.bf16.mxu0 0
    %271 = vmatpush1.bf16.msra.mxu0 %v247
    %272 = vmatprep.subr.bf16.mxu0 0
    %273 = vmatpush1.bf16.msra.mxu0 0
    %274 = vmatprep.subr.bf16.mxu0 0
    %275 = vmatpush1.bf16.msra.mxu0 0
    %276 = vmatprep.subr.bf16.mxu0 0
    %277 = vmatpush1.bf16.msra.mxu0 0
    %278 = vmatprep.subr.bf16.mxu0 0
    %279 = vmatpush1.bf16.msra.mxu0 0
    %280 = vmatprep.subr.bf16.mxu0 0
    %281 = vmatpush1.bf16.msra.mxu0 0
    %282 = vmatprep.subr.bf16.mxu0 0
    %283 = vmatpush1.bf16.msra.mxu0 0
    %284 = vmatprep.subr.bf16.mxu0 0
    %285 = vmatpush1.bf16.msra.mxu0 0
    %286 = vmatprep.subr.bf16.mxu0 0
    %287 = vmatpush1.bf16.msra.mxu0 0
    %288 = vmatprep.mubr.bf16.mxu0 0
    %289 = vmatmul.mubr.bf16.gmra.mrb[0].mxu0 %v184
    %v290 = vpop.f32.mrb[0].mxu0
    %v291 = vadd.f32 %v206, %v290
    %v292 = vpop.f32.mrb[0].mxu0
    %v293 = vpop.f32.mrb[0].mxu0
    %v294 = vpop.f32.mrb[0].mxu0
    %295 = vdwg.mxu0
    %vm296 = vcmp.gt.f32.partialorder %v291, 0.0
    %v297 = vmul.f32 %v291, 0.01
    %v298 = vsel %vm296, %v291, %v297
    %v299 = vpack.c.bf16 %v298, %v298
    %s300 = scalar_lea.vmem [#allocation8], 64
    %v301 = vld [vmem:[%s300] sm:$0xf]
    %v302 = vld [vmem:[%s300 + $0x4] sm:$0xf]
    %v303 = vld [vmem:[%s300 + $0x8] sm:$0xf]
    %v304 = vld [vmem:[%s300 + $0xc] sm:$0xf]
    %v305 = vld [vmem:[%s300 + $0x10] sm:$0xf]
    %v306 = vld [vmem:[%s300 + $0x14] sm:$0xf]
    %v307 = vld [vmem:[%s300 + $0x18] sm:$0xf]
    %v308 = vld [vmem:[%s300 + $0x1c] sm:$0xf]
    %v309 = vld [vmem:[%s300 + $0x20] sm:$0xf]
    %v310 = vld [vmem:[%s300 + $0x24] sm:$0xf]
    %v311 = vld [vmem:[%s300 + $0x28] sm:$0xf]
    %v312 = vld [vmem:[%s300 + $0x2c] sm:$0xf]
    %v313 = vld [vmem:[%s300 + $0x30] sm:$0xf]
    %v314 = vld [vmem:[%s300 + $0x34] sm:$0xf]
    %v315 = vld [vmem:[%s300 + $0x38] sm:$0xf]
    %v316 = vld [vmem:[%s300 + $0x3c] sm:$0xf]
    %s317 = scalar_lea.vmem %s4, 1
    %v318 = vld [vmem:[%s317] sm:$0x1]
    %v320 = vlaneseq
    %v321 = vshrl.u32 %v320, 7
    %v322 = vsub.s32 0, %v321
    %v323 = vrot.slane %v318, %v322
    %v341 = vunpack.c.l.b16 %v301
    %v342 = vunpack.c.l.b16 %v302
    %v343 = vunpack.c.l.b16 %v303
    %v344 = vunpack.c.l.b16 %v304
    %v345 = vunpack.c.l.b16 %v305
    %v346 = vunpack.c.l.b16 %v306
    %v347 = vunpack.c.l.b16 %v307
    %v348 = vunpack.c.l.b16 %v308
    %v349 = vunpack.c.l.b16 %v309
    %v350 = vunpack.c.l.b16 %v310
    %v351 = vunpack.c.l.b16 %v311
    %v352 = vunpack.c.l.b16 %v312
    %v353 = vunpack.c.l.b16 %v313
    %v354 = vunpack.c.l.b16 %v314
    %v355 = vunpack.c.l.b16 %v315
    %v356 = vunpack.c.l.b16 %v316
    %v357 = vpack.c.b16 %v342, %v341
    %v358 = vpack.c.b16 %v344, %v343
    %v359 = vpack.c.b16 %v346, %v345
    %v360 = vpack.c.b16 %v348, %v347
    %v361 = vpack.c.b16 %v350, %v349
    %v362 = vpack.c.b16 %v352, %v351
    %v363 = vpack.c.b16 %v354, %v353
    %v364 = vpack.c.b16 %v356, %v355
    %373 = vmatprep.subr.bf16.mxu0 0
    %374 = vmatpush1.bf16.msra.mxu0 %v357
    %375 = vmatprep.subr.bf16.mxu0 0
    %376 = vmatpush1.bf16.msra.mxu0 %v358
    %377 = vmatprep.subr.bf16.mxu0 0
    %378 = vmatpush1.bf16.msra.mxu0 %v359
    %379 = vmatprep.subr.bf16.mxu0 0
    %380 = vmatpush1.bf16.msra.mxu0 %v360
    %381 = vmatprep.subr.bf16.mxu0 0
    %382 = vmatpush1.bf16.msra.mxu0 %v361
    %383 = vmatprep.subr.bf16.mxu0 0
    %384 = vmatpush1.bf16.msra.mxu0 %v362
    %385 = vmatprep.subr.bf16.mxu0 0
    %386 = vmatpush1.bf16.msra.mxu0 %v363
    %387 = vmatprep.subr.bf16.mxu0 0
    %388 = vmatpush1.bf16.msra.mxu0 %v364
    %389 = vmatprep.subr.bf16.mxu0 0
    %390 = vmatpush1.bf16.msra.mxu0 0
    %391 = vmatprep.subr.bf16.mxu0 0
    %392 = vmatpush1.bf16.msra.mxu0 0
    %393 = vmatprep.subr.bf16.mxu0 0
    %394 = vmatpush1.bf16.msra.mxu0 0
    %395 = vmatprep.subr.bf16.mxu0 0
    %396 = vmatpush1.bf16.msra.mxu0 0
    %397 = vmatprep.subr.bf16.mxu0 0
    %398 = vmatpush1.bf16.msra.mxu0 0
    %399 = vmatprep.subr.bf16.mxu0 0
    %400 = vmatpush1.bf16.msra.mxu0 0
    %401 = vmatprep.subr.bf16.mxu0 0
    %402 = vmatpush1.bf16.msra.mxu0 0
    %403 = vmatprep.subr.bf16.mxu0 0
    %404 = vmatpush1.bf16.msra.mxu0 0
    %405 = vmatprep.mubr.bf16.mxu0 0
    %406 = vmatmul.mubr.bf16.gmra.mrb[0].mxu0 %v299
    %v407 = vpop.f32.mrb[0].mxu0
    %v408 = vadd.f32 %v323, %v407
    %v409 = vpop.f32.mrb[0].mxu0
    %v410 = vpop.f32.mrb[0].mxu0
    %v411 = vpop.f32.mrb[0].mxu0
    %412 = vdwg.mxu0
    %vm413 = vcmp.gt.f32.partialorder %v408, 0.0
    %v414 = vmul.f32 %v408, 0.01
    %v415 = vsel %vm413, %v408, %v414
    %v416 = vpack.c.bf16 %v415, %v415
    %s417 = scalar_lea.vmem [#allocation8], 128
    %v418 = vld [vmem:[%s417] sm:$0xf]
    %v419 = vld [vmem:[%s417 + $0x4] sm:$0xf]
    %v420 = vld [vmem:[%s417 + $0x8] sm:$0xf]
    %v421 = vld [vmem:[%s417 + $0xc] sm:$0xf]
    %v422 = vld [vmem:[%s417 + $0x10] sm:$0xf]
    %v423 = vld [vmem:[%s417 + $0x14] sm:$0xf]
    %v424 = vld [vmem:[%s417 + $0x18] sm:$0xf]
    %v425 = vld [vmem:[%s417 + $0x1c] sm:$0xf]
    %v426 = vld [vmem:[%s417 + $0x20] sm:$0xf]
    %v427 = vld [vmem:[%s417 + $0x24] sm:$0xf]
    %v428 = vld [vmem:[%s417 + $0x28] sm:$0xf]
    %v429 = vld [vmem:[%s417 + $0x2c] sm:$0xf]
    %v430 = vld [vmem:[%s417 + $0x30] sm:$0xf]
    %v431 = vld [vmem:[%s417 + $0x34] sm:$0xf]
    %v432 = vld [vmem:[%s417 + $0x38] sm:$0xf]
    %v433 = vld [vmem:[%s417 + $0x3c] sm:$0xf]
    %s434 = scalar_lea.vmem %s4, 2
    %v435 = vld [vmem:[%s434] sm:$0x1]
    %v437 = vlaneseq
    %v438 = vshrl.u32 %v437, 7
    %v439 = vsub.s32 0, %v438
    %v440 = vrot.slane %v435, %v439
    %v458 = vunpack.c.l.b16 %v418
    %v459 = vunpack.c.l.b16 %v419
    %v460 = vunpack.c.l.b16 %v420
    %v461 = vunpack.c.l.b16 %v421
    %v462 = vunpack.c.l.b16 %v422
    %v463 = vunpack.c.l.b16 %v423
    %v464 = vunpack.c.l.b16 %v424
    %v465 = vunpack.c.l.b16 %v425
    %v466 = vunpack.c.l.b16 %v426
    %v467 = vunpack.c.l.b16 %v427
    %v468 = vunpack.c.l.b16 %v428
    %v469 = vunpack.c.l.b16 %v429
    %v470 = vunpack.c.l.b16 %v430
    %v471 = vunpack.c.l.b16 %v431
    %v472 = vunpack.c.l.b16 %v432
    %v473 = vunpack.c.l.b16 %v433
    %v474 = vpack.c.b16 %v459, %v458
    %v475 = vpack.c.b16 %v461, %v460
    %v476 = vpack.c.b16 %v463, %v462
    %v477 = vpack.c.b16 %v465, %v464
    %v478 = vpack.c.b16 %v467, %v466
    %v479 = vpack.c.b16 %v469, %v468
    %v480 = vpack.c.b16 %v471, %v470
    %v481 = vpack.c.b16 %v473, %v472
    %490 = vmatprep.subr.bf16.mxu0 0
    %491 = vmatpush1.bf16.msra.mxu0 %v474
    %492 = vmatprep.subr.bf16.mxu0 0
    %493 = vmatpush1.bf16.msra.mxu0 %v475
    %494 = vmatprep.subr.bf16.mxu0 0
    %495 = vmatpush1.bf16.msra.mxu0 %v476
    %496 = vmatprep.subr.bf16.mxu0 0
    %497 = vmatpush1.bf16.msra.mxu0 %v477
    %498 = vmatprep.subr.bf16.mxu0 0
    %499 = vmatpush1.bf16.msra.mxu0 %v478
    %500 = vmatprep.subr.bf16.mxu0 0
    %501 = vmatpush1.bf16.msra.mxu0 %v479
    %502 = vmatprep.subr.bf16.mxu0 0
    %503 = vmatpush1.bf16.msra.mxu0 %v480
    %504 = vmatprep.subr.bf16.mxu0 0
    %505 = vmatpush1.bf16.msra.mxu0 %v481
    %506 = vmatprep.subr.bf16.mxu0 0
    %507 = vmatpush1.bf16.msra.mxu0 0
    %508 = vmatprep.subr.bf16.mxu0 0
    %509 = vmatpush1.bf16.msra.mxu0 0
    %510 = vmatprep.subr.bf16.mxu0 0
    %511 = vmatpush1.bf16.msra.mxu0 0
    %512 = vmatprep.subr.bf16.mxu0 0
    %513 = vmatpush1.bf16.msra.mxu0 0
    %514 = vmatprep.subr.bf16.mxu0 0
    %515 = vmatpush1.bf16.msra.mxu0 0
    %516 = vmatprep.subr.bf16.mxu0 0
    %517 = vmatpush1.bf16.msra.mxu0 0
    %518 = vmatprep.subr.bf16.mxu0 0
    %519 = vmatpush1.bf16.msra.mxu0 0
    %520 = vmatprep.subr.bf16.mxu0 0
    %521 = vmatpush1.bf16.msra.mxu0 0
    %522 = vmatprep.mubr.bf16.mxu0 0
    %523 = vmatmul.mubr.bf16.gmra.mrb[0].mxu0 %v416
    %v524 = vpop.f32.mrb[0].mxu0
    %v525 = vadd.f32 %v440, %v524
    %v526 = vpop.f32.mrb[0].mxu0
    %v527 = vpop.f32.mrb[0].mxu0
    %v528 = vpop.f32.mrb[0].mxu0
    %529 = vdwg.mxu0
    %vm530 = vcmp.gt.f32.partialorder %v525, 0.0
    %v531 = vmul.f32 %v525, 0.01
    %v532 = vsel %vm530, %v525, %v531
    %v533 = vld [vmem:[%s5] sm:$0x1]
    %v534 = vpack.c.bf16 %v532, %v532
    %v535 = vld [vmem:[#allocation2] sm:$0x1]
    %537 = vset.pattern.permute.xlu0 0
    %538 = vperm.xlu0 %537, %v535
    %v539 = vpop.permute.xlu0 %538
    %v541 = vlaneseq
    %v542 = vshrl.u32 %v541, 7
    %v543 = vsub.s32 0, %v542
    %v544 = vrot.slane %v539, %v543
    %545 = vmatprep.subr.bf16.mxu0 0
    %546 = vmatpush1.bf16.xpose.msra.mxu0 %v534
    %547 = vmatprep.subr.bf16.mxu0 0
    %548 = vmatpush1.bf16.xpose.msra.mxu0 0
    %549 = vmatprep.subr.bf16.mxu0 0
    %550 = vmatpush1.bf16.xpose.msra.mxu0 0
    %551 = vmatprep.subr.bf16.mxu0 0
    %552 = vmatpush1.bf16.xpose.msra.mxu0 0
    %553 = vmatprep.subr.bf16.mxu0 0
    %554 = vmatpush1.bf16.xpose.msra.mxu0 0
    %555 = vmatprep.subr.bf16.mxu0 0
    %556 = vmatpush1.bf16.xpose.msra.mxu0 0
    %557 = vmatprep.subr.bf16.mxu0 0
    %558 = vmatpush1.bf16.xpose.msra.mxu0 0
    %559 = vmatprep.subr.bf16.mxu0 0
    %560 = vmatpush1.bf16.xpose.msra.mxu0 0
    %561 = vmatprep.subr.bf16.mxu0 0
    %562 = vmatpush1.bf16.xpose.msra.mxu0 0
    %563 = vmatprep.subr.bf16.mxu0 0
    %564 = vmatpush1.bf16.xpose.msra.mxu0 0
    %565 = vmatprep.subr.bf16.mxu0 0
    %566 = vmatpush1.bf16.xpose.msra.mxu0 0
    %567 = vmatprep.subr.bf16.mxu0 0
    %568 = vmatpush1.bf16.xpose.msra.mxu0 0
    %569 = vmatprep.subr.bf16.mxu0 0
    %570 = vmatpush1.bf16.xpose.msra.mxu0 0
    %571 = vmatprep.subr.bf16.mxu0 0
    %572 = vmatpush1.bf16.xpose.msra.mxu0 0
    %573 = vmatprep.subr.bf16.mxu0 0
    %574 = vmatpush1.bf16.xpose.msra.mxu0 0
    %575 = vmatprep.subr.bf16.mxu0 0
    %576 = vmatpush1.bf16.xpose.msra.mxu0 0
    %577 = vmatprep.mubr.bf16.mxu0 0
    %578 = vmatmul.mubr.bf16.gmra.mrb[0].mxu0 %v533
    %v579 = vpop.f32.mrb[0].mxu0
    %v580 = vadd.f32 %v544, %v579
    %v581 = vpop.f32.mrb[0].mxu0
    %v582 = vpop.f32.mrb[0].mxu0
    %v583 = vpop.f32.mrb[0].mxu0
    %584 = vdwg.mxu0
    %vm585 = vcmask 57344
    %586 = vst.msk [vmem:[#allocation9] sm:$0x1] %vm585, %v580
    // Predicated region
    $region42: #{tpu_custom_call.1} parent=1 // pred_check
      _
    $region43: #{tpu_custom_call.1} parent=1 // pred_check_branch
      %588 = sbr.rel (0) target = $region45
    $region44: #{tpu_custom_call.1} parent=1 // pred_region
      %s590 = ssub.s32 16, 16
      %591 = vsyncadd [#allocation5], %s590
      %s593 = sshll.u32 [#allocation9], 4
      %s594 = int_to_ptr.vmem [resolvable:$true] %s593
      %596 = dma.vmem_to_hbm [thread:$0]  %s594, 16, %s7, [#allocation5]
    $region45: #{tpu_custom_call.1} parent=1 // pred_fallthru
      _
    // Predicated region
    $region46: #{tpu_custom_call.1} parent=1 // pred_check
      _
    $region47: #{tpu_custom_call.1} parent=1 // pred_check_branch
      %598 = sbr.rel (0) target = $region49
    $region48: #{tpu_custom_call.1} parent=1 // pred_region
      %599 = dma.done [#allocation5], 16
    $region49: #{tpu_custom_call.1} parent=1 // pred_fallthru
      _
    %600 = vsyncpa [#allocation4], 1
    %601 = vsyncpa [#allocation7], 1
    %602 = vsyncpa [#allocation5], 1

// kernel: tpu_custom_call.1
$region0: #{tpu_custom_call.1}
  #allocation0 [shape = 'u32[]', space=smem, size = 0x4, offset = 0x4, fixed_abs, tag = 'smem constant byte address 0x4 - core index']
  #allocation1 [shape = 'u32[144,128]{1,0:T(1,128)}', space=vmem, size = 0x12000, scoped, tag = 'internal scratch']
  #allocation2 [shape = 'f32[1,1]{1,0:T(1,128)S(1)}', space=vmem, size = 0x200, scoped, tag = 'scoped memory for tpu_custom_call.1']
  %s0 = inlined_call_operand.hbm [shape: bf16[8,128], index: 0, kind: input, shape index: {}]
  %s1 = inlined_call_operand.hbm [shape: bf16[128,128], index: 1, kind: input, shape index: {}]
  %s2 = inlined_call_operand.vmem [shape: f32[1,128], index: 2, kind: input, shape index: {}]
  %s3 = inlined_call_operand.hbm [shape: bf16[3,128,128], index: 3, kind: input, shape index: {}]
  %s4 = inlined_call_operand.vmem [shape: f32[3,1,128], index: 4, kind: input, shape index: {}]
  %s5 = inlined_call_operand.vmem [shape: bf16[1,128], index: 5, kind: input, shape index: {}]
  %s6 = inlined_call_operand.<no memory space> [shape: f32[1,1], index: 6, kind: input, shape index: {}]
  %s7 = inlined_call_operand.hbm [shape: f32[1,8], index: 7, kind: output, shape index: {}]
  %s8 = sld [smem:[#allocation0]]
  $region50: #{tpu_custom_call.1} parent=0
    _
  %s10 = ssub.s32 1, %s8
  %s11 = scalar_select 0, %s10, %s8
  %v12 = vstv %s6
  %13 = vst [vmem:[#allocation2] sm:$0x1] %v12
  $region1: #{tpu_custom_call.1} parent=0
    #allocation3 [shape = 'u8[2048]{0}', space=vmem, size = 0x800, scoped, tag = 'input window, operand 0, single buffered']
    #allocation4 [shape = 's32[1]{0}', space=sflag, size = 0x4, scoped, tag = 'scoped memory for tpu_custom_call.1']
    #allocation5 [shape = 's32[1]{0}', space=sflag, size = 0x4, scoped, tag = 'scoped memory for tpu_custom_call.1']
    #allocation6 [shape = 'u8[32768]{0}', space=vmem, size = 0x8000, scoped, tag = 'input window, operand 1, single buffered']
    #allocation7 [shape = 's32[1]{0}', space=sflag, size = 0x4, scoped, tag = 'scoped memory for tpu_custom_call.1']
    #allocation8 [shape = 'u8[98304]{0}', space=vmem, size = 0x18000, scoped, tag = 'input window, operand 3, single buffered']
    #allocation9 [shape = 'u8[512]{0}', space=vmem, size = 0x400, scoped, tag = 'output window, operand 0, single buffered']
    %14 = vsyncpa [#allocation4], 0
    %15 = vsyncpa [#allocation7], 0
    %16 = vsyncpa [#allocation5], 0
    // Predicated region
    $region2: #{tpu_custom_call.1} parent=1 // pred_check
      _
    $region3: #{tpu_custom_call.1} parent=1 // pred_check_branch
      %18 = sbr.rel (0) target = $region5
    $region4: #{tpu_custom_call.1} parent=1 // pred_region
      %s20 = ssub.s32 64, 64
      %21 = vsyncadd [#allocation4], %s20
      %s23 = sshll.u32 [#allocation3], 4
      %s24 = int_to_ptr.vmem [resolvable:$true] %s23
      %26 = dma.hbm_to_vmem [thread:$0]  %s0, 64, %s24, [#allocation4]
    $region5: #{tpu_custom_call.1} parent=1 // pred_fallthru
      _
    // Predicated region
    $region6: #{tpu_custom_call.1} parent=1 // pred_check
      _
    $region7: #{tpu_custom_call.1} parent=1 // pred_check_branch
      %28 = sbr.rel (0) target = $region9
    $region8: #{tpu_custom_call.1} parent=1 // pred_region
      %s30 = ssub.s32 1024, 1024
      %31 = vsyncadd [#allocation7], %s30
      %s32 = sshll.u32 [#allocation6], 4
      %s33 = int_to_ptr.vmem [resolvable:$true] %s32
      %38 = dma.hbm_to_vmem [thread:$0]  %s1, 1024, %s33, [#allocation7], 64, 64, 4
    $region9: #{tpu_custom_call.1} parent=1 // pred_fallthru
      _
    // Predicated region
    $region10: #{tpu_custom_call.1} parent=1 // pred_check
      _
    $region11: #{tpu_custom_call.1} parent=1 // pred_check_branch
      %40 = sbr.rel (0) target = $region13
    $region12: #{tpu_custom_call.1} parent=1 // pred_region
      _
    $region13: #{tpu_custom_call.1} parent=1 // pred_fallthru
      _
    // Predicated region
    $region14: #{tpu_custom_call.1} parent=1 // pred_check
      _
    $region15: #{tpu_custom_call.1} parent=1 // pred_check_branch
      %42 = sbr.rel (0) target = $region17
    $region16: #{tpu_custom_call.1} parent=1 // pred_region
      %s44 = ssub.s32 3072, 3072
      %45 = vsyncadd [#allocation7], %s44
      %s46 = sshll.u32 [#allocation8], 4
      %s47 = int_to_ptr.vmem [resolvable:$true] %s46
      %52 = dma.hbm_to_vmem [thread:$0]  %s3, 3072, %s47, [#allocation7], 64, 64, 4
    $region17: #{tpu_custom_call.1} parent=1 // pred_fallthru
      _
    // Predicated region
    $region18: #{tpu_custom_call.1} parent=1 // pred_check
      _
    $region19: #{tpu_custom_call.1} parent=1 // pred_check_branch
      %54 = sbr.rel (0) target = $region21
    $region20: #{tpu_custom_call.1} parent=1 // pred_region
      _
    $region21: #{tpu_custom_call.1} parent=1 // pred_fallthru
      _
    // Predicated region
    $region22: #{tpu_custom_call.1} parent=1 // pred_check
      _
    $region23: #{tpu_custom_call.1} parent=1 // pred_check_branch
      %56 = sbr.rel (0) target = $region25
    $region24: #{tpu_custom_call.1} parent=1 // pred_region
      _
    $region25: #{tpu_custom_call.1} parent=1 // pred_fallthru
      _
    // Predicated region
    $region26: #{tpu_custom_call.1} parent=1 // pred_check
      _
    $region27: #{tpu_custom_call.1} parent=1 // pred_check_branch
      %58 = sbr.rel (0) target = $region29
    $region28: #{tpu_custom_call.1} parent=1 // pred_region
      _
    $region29: #{tpu_custom_call.1} parent=1 // pred_fallthru
      _
    // Predicated region
    $region30: #{tpu_custom_call.1} parent=1 // pred_check
      _
    $region31: #{tpu_custom_call.1} parent=1 // pred_check_branch
      %60 = sbr.rel (0) target = $region33
    $region32: #{tpu_custom_call.1} parent=1 // pred_region
      %61 = dma.done [#allocation4], 64
    $region33: #{tpu_custom_call.1} parent=1 // pred_fallthru
      _
    // Predicated region
    $region34: #{tpu_custom_call.1} parent=1 // pred_check
      _
    $region35: #{tpu_custom_call.1} parent=1 // pred_check_branch
      %63 = sbr.rel (0) target = $region37
    $region36: #{tpu_custom_call.1} parent=1 // pred_region
      %64 = dma.done [#allocation7], 1024
    $region37: #{tpu_custom_call.1} parent=1 // pred_fallthru
      _
    // Predicated region
    $region38: #{tpu_custom_call.1} parent=1 // pred_check
      _
    $region39: #{tpu_custom_call.1} parent=1 // pred_check_branch
      %66 = sbr.rel (0) target = $region41
    $region40: #{tpu_custom_call.1} parent=1 // pred_region
      %67 = dma.done [#allocation7], 3072
    $region41: #{tpu_custom_call.1} parent=1 // pred_fallthru
      _
    %v69 = vld [vmem:[#allocation3] sm:$0xf]
    %v70 = vld [vmem:[#allocation6] sm:$0xf]
    %v71 = vld [vmem:[#allocation6 + $0x4] sm:$0xf]
    %v72 = vld [vmem:[#allocation6 + $0x8] sm:$0xf]
    %v73 = vld [vmem:[#allocation6 + $0xc] sm:$0xf]
    %v74 = vld [vmem:[#allocation6 + $0x10] sm:$0xf]
    %v75 = vld [vmem:[#allocation6 + $0x14] sm:$0xf]
    %v76 = vld [vmem:[#allocation6 + $0x18] sm:$0xf]
    %v77 = vld [vmem:[#allocation6 + $0x1c] sm:$0xf]
    %v78 = vld [vmem:[#allocation6 + $0x20] sm:$0xf]
    %v79 = vld [vmem:[#allocation6 + $0x24] sm:$0xf]
    %v80 = vld [vmem:[#allocation6 + $0x28] sm:$0xf]
    %v81 = vld [vmem:[#allocation6 + $0x2c] sm:$0xf]
    %v82 = vld [vmem:[#allocation6 + $0x30] sm:$0xf]
    %v83 = vld [vmem:[#allocation6 + $0x34] sm:$0xf]
    %v84 = vld [vmem:[#allocation6 + $0x38] sm:$0xf]
    %v85 = vld [vmem:[#allocation6 + $0x3c] sm:$0xf]
    %v86 = vld [vmem:[%s2] sm:$0x1]
    %v88 = vlaneseq
    %v89 = vshrl.u32 %v88, 7
    %v90 = vsub.s32 0, %v89
    %v91 = vrot.slane %v86, %v90
    %v109 = vunpack.c.l.b16 %v70
    %v110 = vunpack.c.l.b16 %v71
    %v111 = vunpack.c.l.b16 %v72
    %v112 = vunpack.c.l.b16 %v73
    %v113 = vunpack.c.l.b16 %v74
    %v114 = vunpack.c.l.b16 %v75
    %v115 = vunpack.c.l.b16 %v76
    %v116 = vunpack.c.l.b16 %v77
    %v117 = vunpack.c.l.b16 %v78
    %v118 = vunpack.c.l.b16 %v79
    %v119 = vunpack.c.l.b16 %v80
    %v120 = vunpack.c.l.b16 %v81
    %v121 = vunpack.c.l.b16 %v82
    %v122 = vunpack.c.l.b16 %v83
    %v123 = vunpack.c.l.b16 %v84
    %v124 = vunpack.c.l.b16 %v85
    %v125 = vpack.c.b16 %v110, %v109
    %v126 = vpack.c.b16 %v112, %v111
    %v127 = vpack.c.b16 %v114, %v113
    %v128 = vpack.c.b16 %v116, %v115
    %v129 = vpack.c.b16 %v118, %v117
    %v130 = vpack.c.b16 %v120, %v119
    %v131 = vpack.c.b16 %v122, %v121
    %v132 = vpack.c.b16 %v124, %v123
    %141 = vmatprep.subr.bf16.mxu0 0
    %142 = vmatpush1.bf16.msra.mxu0 %v125
    %143 = vmatprep.subr.bf16.mxu0 0
    %144 = vmatpush1.bf16.msra.mxu0 %v126
    %145 = vmatprep.subr.bf16.mxu0 0
    %146 = vmatpush1.bf16.msra.mxu0 %v127
    %147 = vmatprep.subr.bf16.mxu0 0
    %148 = vmatpush1.bf16.msra.mxu0 %v128
    %149 = vmatprep.subr.bf16.mxu0 0
    %150 = vmatpush1.bf16.msra.mxu0 %v129
    %151 = vmatprep.subr.bf16.mxu0 0
    %152 = vmatpush1.bf16.msra.mxu0 %v130
    %153 = vmatprep.subr.bf16.mxu0 0
    %154 = vmatpush1.bf16.msra.mxu0 %v131
    %155 = vmatprep.subr.bf16.mxu0 0
    %156 = vmatpush1.bf16.msra.mxu0 %v132
    %157 = vmatprep.subr.bf16.mxu0 0
    %158 = vmatpush1.bf16.msra.mxu0 0
    %159 = vmatprep.subr.bf16.mxu0 0
    %160 = vmatpush1.bf16.msra.mxu0 0
    %161 = vmatprep.subr.bf16.mxu0 0
    %162 = vmatpush1.bf16.msra.mxu0 0
    %163 = vmatprep.subr.bf16.mxu0 0
    %164 = vmatpush1.bf16.msra.mxu0 0
    %165 = vmatprep.subr.bf16.mxu0 0
    %166 = vmatpush1.bf16.msra.mxu0 0
    %167 = vmatprep.subr.bf16.mxu0 0
    %168 = vmatpush1.bf16.msra.mxu0 0
    %169 = vmatprep.subr.bf16.mxu0 0
    %170 = vmatpush1.bf16.msra.mxu0 0
    %171 = vmatprep.subr.bf16.mxu0 0
    %172 = vmatpush1.bf16.msra.mxu0 0
    %173 = vmatprep.mubr.bf16.mxu0 0
    %174 = vmatmul.mubr.bf16.gmra.mrb[0].mxu0 %v69
    %v175 = vpop.f32.mrb[0].mxu0
    %v176 = vadd.f32 %v91, %v175
    %v177 = vpop.f32.mrb[0].mxu0
    %v178 = vpop.f32.mrb[0].mxu0
    %v179 = vpop.f32.mrb[0].mxu0
    %180 = vdwg.mxu0
    %vm181 = vcmp.gt.f32.partialorder %v176, 0.0
    %v182 = vmul.f32 %v176, 0.01
    %v183 = vsel %vm181, %v176, %v182
    %v184 = vpack.c.bf16 %v183, %v183
    %v185 = vld [vmem:[#allocation8] sm:$0xf]
    %v186 = vld [vmem:[#allocation8 + $0x4] sm:$0xf]
    %v187 = vld [vmem:[#allocation8 + $0x8] sm:$0xf]
    %v188 = vld [vmem:[#allocation8 + $0xc] sm:$0xf]
    %v189 = vld [vmem:[#allocation8 + $0x10] sm:$0xf]
    %v190 = vld [vmem:[#allocation8 + $0x14] sm:$0xf]
    %v191 = vld [vmem:[#allocation8 + $0x18] sm:$0xf]
    %v192 = vld [vmem:[#allocation8 + $0x1c] sm:$0xf]
    %v193 = vld [vmem:[#allocation8 + $0x20] sm:$0xf]
    %v194 = vld [vmem:[#allocation8 + $0x24] sm:$0xf]
    %v195 = vld [vmem:[#allocation8 + $0x28] sm:$0xf]
    %v196 = vld [vmem:[#allocation8 + $0x2c] sm:$0xf]
    %v197 = vld [vmem:[#allocation8 + $0x30] sm:$0xf]
    %v198 = vld [vmem:[#allocation8 + $0x34] sm:$0xf]
    %v199 = vld [vmem:[#allocation8 + $0x38] sm:$0xf]
    %v200 = vld [vmem:[#allocation8 + $0x3c] sm:$0xf]
    %v201 = vld [vmem:[%s4] sm:$0x1]
    %v203 = vlaneseq
    %v204 = vshrl.u32 %v203, 7
    %v205 = vsub.s32 0, %v204
    %v206 = vrot.slane %v201, %v205
    %v224 = vunpack.c.l.b16 %v185
    %v225 = vunpack.c.l.b16 %v186
    %v226 = vunpack.c.l.b16 %v187
    %v227 = vunpack.c.l.b16 %v188
    %v228 = vunpack.c.l.b16 %v189
    %v229 = vunpack.c.l.b16 %v190
    %v230 = vunpack.c.l.b16 %v191
    %v231 = vunpack.c.l.b16 %v192
    %v232 = vunpack.c.l.b16 %v193
    %v233 = vunpack.c.l.b16 %v194
    %v234 = vunpack.c.l.b16 %v195
    %v235 = vunpack.c.l.b16 %v196
    %v236 = vunpack.c.l.b16 %v197
    %v237 = vunpack.c.l.b16 %v198
    %v238 = vunpack.c.l.b16 %v199
    %v239 = vunpack.c.l.b16 %v200
    %v240 = vpack.c.b16 %v225, %v224
    %v241 = vpack.c.b16 %v227, %v226
    %v242 = vpack.c.b16 %v229, %v228
    %v243 = vpack.c.b16 %v231, %v230
    %v244 = vpack.c.b16 %v233, %v232
    %v245 = vpack.c.b16 %v235, %v234
    %v246 = vpack.c.b16 %v237, %v236
    %v247 = vpack.c.b16 %v239, %v238
    %256 = vmatprep.subr.bf16.mxu0 0
    %257 = vmatpush1.bf16.msra.mxu0 %v240
    %258 = vmatprep.subr.bf16.mxu0 0
    %259 = vmatpush1.bf16.msra.mxu0 %v241
    %260 = vmatprep.subr.bf16.mxu0 0
    %261 = vmatpush1.bf16.msra.mxu0 %v242
    %262 = vmatprep.subr.bf16.mxu0 0
    %263 = vmatpush1.bf16.msra.mxu0 %v243
    %264 = vmatprep.subr.bf16.mxu0 0
    %265 = vmatpush1.bf16.msra.mxu0 %v244
    %266 = vmatprep.subr.bf16.mxu0 0
    %267 = vmatpush1.bf16.msra.mxu0 %v245
    %268 = vmatprep.subr.bf16.mxu0 0
    %269 = vmatpush1.bf16.msra.mxu0 %v246
    %270 = vmatprep.subr.bf16.mxu0 0
    %271 = vmatpush1.bf16.msra.mxu0 %v247
    %272 = vmatprep.subr.bf16.mxu0 0
    %273 = vmatpush1.bf16.msra.mxu0 0
    %274 = vmatprep.subr.bf16.mxu0 0
    %275 = vmatpush1.bf16.msra.mxu0 0
    %276 = vmatprep.subr.bf16.mxu0 0
    %277 = vmatpush1.bf16.msra.mxu0 0
    %278 = vmatprep.subr.bf16.mxu0 0
    %279 = vmatpush1.bf16.msra.mxu0 0
    %280 = vmatprep.subr.bf16.mxu0 0
    %281 = vmatpush1.bf16.msra.mxu0 0
    %282 = vmatprep.subr.bf16.mxu0 0
    %283 = vmatpush1.bf16.msra.mxu0 0
    %284 = vmatprep.subr.bf16.mxu0 0
    %285 = vmatpush1.bf16.msra.mxu0 0
    %286 = vmatprep.subr.bf16.mxu0 0
    %287 = vmatpush1.bf16.msra.mxu0 0
    %288 = vmatprep.mubr.bf16.mxu0 0
    %289 = vmatmul.mubr.bf16.gmra.mrb[0].mxu0 %v184
    %v290 = vpop.f32.mrb[0].mxu0
    %v291 = vadd.f32 %v206, %v290
    %v292 = vpop.f32.mrb[0].mxu0
    %v293 = vpop.f32.mrb[0].mxu0
    %v294 = vpop.f32.mrb[0].mxu0
    %295 = vdwg.mxu0
    %vm296 = vcmp.gt.f32.partialorder %v291, 0.0
    %v297 = vmul.f32 %v291, 0.01
    %v298 = vsel %vm296, %v291, %v297
    %v299 = vpack.c.bf16 %v298, %v298
    %s300 = scalar_lea.vmem [#allocation8], 64
    %v301 = vld [vmem:[%s300] sm:$0xf]
    %v302 = vld [vmem:[%s300 + $0x4] sm:$0xf]
    %v303 = vld [vmem:[%s300 + $0x8] sm:$0xf]
    %v304 = vld [vmem:[%s300 + $0xc] sm:$0xf]
    %v305 = vld [vmem:[%s300 + $0x10] sm:$0xf]
    %v306 = vld [vmem:[%s300 + $0x14] sm:$0xf]
    %v307 = vld [vmem:[%s300 + $0x18] sm:$0xf]
    %v308 = vld [vmem:[%s300 + $0x1c] sm:$0xf]
    %v309 = vld [vmem:[%s300 + $0x20] sm:$0xf]
    %v310 = vld [vmem:[%s300 + $0x24] sm:$0xf]
    %v311 = vld [vmem:[%s300 + $0x28] sm:$0xf]
    %v312 = vld [vmem:[%s300 + $0x2c] sm:$0xf]
    %v313 = vld [vmem:[%s300 + $0x30] sm:$0xf]
    %v314 = vld [vmem:[%s300 + $0x34] sm:$0xf]
    %v315 = vld [vmem:[%s300 + $0x38] sm:$0xf]
    %v316 = vld [vmem:[%s300 + $0x3c] sm:$0xf]
    %s317 = scalar_lea.vmem %s4, 1
    %v318 = vld [vmem:[%s317] sm:$0x1]
    %v320 = vlaneseq
    %v321 = vshrl.u32 %v320, 7
    %v322 = vsub.s32 0, %v321
    %v323 = vrot.slane %v318, %v322
    %v341 = vunpack.c.l.b16 %v301
    %v342 = vunpack.c.l.b16 %v302
    %v343 = vunpack.c.l.b16 %v303
    %v344 = vunpack.c.l.b16 %v304
    %v345 = vunpack.c.l.b16 %v305
    %v346 = vunpack.c.l.b16 %v306
    %v347 = vunpack.c.l.b16 %v307
    %v348 = vunpack.c.l.b16 %v308
    %v349 = vunpack.c.l.b16 %v309
    %v350 = vunpack.c.l.b16 %v310
    %v351 = vunpack.c.l.b16 %v311
    %v352 = vunpack.c.l.b16 %v312
    %v353 = vunpack.c.l.b16 %v313
    %v354 = vunpack.c.l.b16 %v314
    %v355 = vunpack.c.l.b16 %v315
    %v356 = vunpack.c.l.b16 %v316
    %v357 = vpack.c.b16 %v342, %v341
    %v358 = vpack.c.b16 %v344, %v343
    %v359 = vpack.c.b16 %v346, %v345
    %v360 = vpack.c.b16 %v348, %v347
    %v361 = vpack.c.b16 %v350, %v349
    %v362 = vpack.c.b16 %v352, %v351
    %v363 = vpack.c.b16 %v354, %v353
    %v364 = vpack.c.b16 %v356, %v355
    %373 = vmatprep.subr.bf16.mxu0 0
    %374 = vmatpush1.bf16.msra.mxu0 %v357
    %375 = vmatprep.subr.bf16.mxu0 0
    %376 = vmatpush1.bf16.msra.mxu0 %v358
    %377 = vmatprep.subr.bf16.mxu0 0
    %378 = vmatpush1.bf16.msra.mxu0 %v359
    %379 = vmatprep.subr.bf16.mxu0 0
    %380 = vmatpush1.bf16.msra.mxu0 %v360
    %381 = vmatprep.subr.bf16.mxu0 0
    %382 = vmatpush1.bf16.msra.mxu0 %v361
    %383 = vmatprep.subr.bf16.mxu0 0
    %384 = vmatpush1.bf16.msra.mxu0 %v362
    %385 = vmatprep.subr.bf16.mxu0 0
    %386 = vmatpush1.bf16.msra.mxu0 %v363
    %387 = vmatprep.subr.bf16.mxu0 0
    %388 = vmatpush1.bf16.msra.mxu0 %v364
    %389 = vmatprep.subr.bf16.mxu0 0
    %390 = vmatpush1.bf16.msra.mxu0 0
    %391 = vmatprep.subr.bf16.mxu0 0
    %392 = vmatpush1.bf16.msra.mxu0 0
    %393 = vmatprep.subr.bf16.mxu0 0
    %394 = vmatpush1.bf16.msra.mxu0 0
    %395 = vmatprep.subr.bf16.mxu0 0
    %396 = vmatpush1.bf16.msra.mxu0 0
    %397 = vmatprep.subr.bf16.mxu0 0
    %398 = vmatpush1.bf16.msra.mxu0 0
    %399 = vmatprep.subr.bf16.mxu0 0
    %400 = vmatpush1.bf16.msra.mxu0 0
    %401 = vmatprep.subr.bf16.mxu0 0
    %402 = vmatpush1.bf16.msra.mxu0 0
    %403 = vmatprep.subr.bf16.mxu0 0
    %404 = vmatpush1.bf16.msra.mxu0 0
    %405 = vmatprep.mubr.bf16.mxu0 0
    %406 = vmatmul.mubr.bf16.gmra.mrb[0].mxu0 %v299
    %v407 = vpop.f32.mrb[0].mxu0
    %v408 = vadd.f32 %v323, %v407
    %v409 = vpop.f32.mrb[0].mxu0
    %v410 = vpop.f32.mrb[0].mxu0
    %v411 = vpop.f32.mrb[0].mxu0
    %412 = vdwg.mxu0
    %vm413 = vcmp.gt.f32.partialorder %v408, 0.0
    %v414 = vmul.f32 %v408, 0.01
    %v415 = vsel %vm413, %v408, %v414
    %v416 = vpack.c.bf16 %v415, %v415
    %s417 = scalar_lea.vmem [#allocation8], 128
    %v418 = vld [vmem:[%s417] sm:$0xf]
    %v419 = vld [vmem:[%s417 + $0x4] sm:$0xf]
    %v420 = vld [vmem:[%s417 + $0x8] sm:$0xf]
    %v421 = vld [vmem:[%s417 + $0xc] sm:$0xf]
    %v422 = vld [vmem:[%s417 + $0x10] sm:$0xf]
    %v423 = vld [vmem:[%s417 + $0x14] sm:$0xf]
    %v424 = vld [vmem:[%s417 + $0x18] sm:$0xf]
    %v425 = vld [vmem:[%s417 + $0x1c] sm:$0xf]
    %v426 = vld [vmem:[%s417 + $0x20] sm:$0xf]
    %v427 = vld [vmem:[%s417 + $0x24] sm:$0xf]
    %v428 = vld [vmem:[%s417 + $0x28] sm:$0xf]
    %v429 = vld [vmem:[%s417 + $0x2c] sm:$0xf]
    %v430 = vld [vmem:[%s417 + $0x30] sm:$0xf]
    %v431 = vld [vmem:[%s417 + $0x34] sm:$0xf]
    %v432 = vld [vmem:[%s417 + $0x38] sm:$0xf]
    %v433 = vld [vmem:[%s417 + $0x3c] sm:$0xf]
    %s434 = scalar_lea.vmem %s4, 2
    %v435 = vld [vmem:[%s434] sm:$0x1]
    %v437 = vlaneseq
    %v438 = vshrl.u32 %v437, 7
    %v439 = vsub.s32 0, %v438
    %v440 = vrot.slane %v435, %v439
    %v458 = vunpack.c.l.b16 %v418
    %v459 = vunpack.c.l.b16 %v419
    %v460 = vunpack.c.l.b16 %v420
    %v461 = vunpack.c.l.b16 %v421
    %v462 = vunpack.c.l.b16 %v422
    %v463 = vunpack.c.l.b16 %v423
    %v464 = vunpack.c.l.b16 %v424
    %v465 = vunpack.c.l.b16 %v425
    %v466 = vunpack.c.l.b16 %v426
    %v467 = vunpack.c.l.b16 %v427
    %v468 = vunpack.c.l.b16 %v428
    %v469 = vunpack.c.l.b16 %v429
    %v470 = vunpack.c.l.b16 %v430
    %v471 = vunpack.c.l.b16 %v431
    %v472 = vunpack.c.l.b16 %v432
    %v473 = vunpack.c.l.b16 %v433
    %v474 = vpack.c.b16 %v459, %v458
    %v475 = vpack.c.b16 %v461, %v460
    %v476 = vpack.c.b16 %v463, %v462
    %v477 = vpack.c.b16 %v465, %v464
    %v478 = vpack.c.b16 %v467, %v466
    %v479 = vpack.c.b16 %v469, %v468
    %v480 = vpack.c.b16 %v471, %v470
    %v481 = vpack.c.b16 %v473, %v472
    %490 = vmatprep.subr.bf16.mxu0 0
    %491 = vmatpush1.bf16.msra.mxu0 %v474
    %492 = vmatprep.subr.bf16.mxu0 0
    %493 = vmatpush1.bf16.msra.mxu0 %v475
    %494 = vmatprep.subr.bf16.mxu0 0
    %495 = vmatpush1.bf16.msra.mxu0 %v476
    %496 = vmatprep.subr.bf16.mxu0 0
    %497 = vmatpush1.bf16.msra.mxu0 %v477
    %498 = vmatprep.subr.bf16.mxu0 0
    %499 = vmatpush1.bf16.msra.mxu0 %v478
    %500 = vmatprep.subr.bf16.mxu0 0
    %501 = vmatpush1.bf16.msra.mxu0 %v479
    %502 = vmatprep.subr.bf16.mxu0 0
    %503 = vmatpush1.bf16.msra.mxu0 %v480
    %504 = vmatprep.subr.bf16.mxu0 0
    %505 = vmatpush1.bf16.msra.mxu0 %v481
    %506 = vmatprep.subr.bf16.mxu0 0
    %507 = vmatpush1.bf16.msra.mxu0 0
    %508 = vmatprep.subr.bf16.mxu0 0
    %509 = vmatpush1.bf16.msra.mxu0 0
    %510 = vmatprep.subr.bf16.mxu0 0
    %511 = vmatpush1.bf16.msra.mxu0 0
    %512 = vmatprep.subr.bf16.mxu0 0
    %513 = vmatpush1.bf16.msra.mxu0 0
    %514 = vmatprep.subr.bf16.mxu0 0
    %515 = vmatpush1.bf16.msra.mxu0 0
    %516 = vmatprep.subr.bf16.mxu0 0
    %517 = vmatpush1.bf16.msra.mxu0 0
    %518 = vmatprep.subr.bf16.mxu0 0
    %519 = vmatpush1.bf16.msra.mxu0 0
    %520 = vmatprep.subr.bf16.mxu0 0
    %521 = vmatpush1.bf16.msra.mxu0 0
    %522 = vmatprep.mubr.bf16.mxu0 0
    %523 = vmatmul.mubr.bf16.gmra.mrb[0].mxu0 %v416
    %v524 = vpop.f32.mrb[0].mxu0
    %v525 = vadd.f32 %v440, %v524
    %v526 = vpop.f32.mrb[0].mxu0
    %v527 = vpop.f32.mrb[0].mxu0
    %v528 = vpop.f32.mrb[0].mxu0
    %529 = vdwg.mxu0
    %vm530 = vcmp.gt.f32.partialorder %v525, 0.0
    %v531 = vmul.f32 %v525, 0.01
    %v532 = vsel %vm530, %v525, %v531
    %v533 = vld [vmem:[%s5] sm:$0x1]
    %v534 = vpack.c.bf16 %v532, %v532
    %v535 = vld [vmem:[#allocation2] sm:$0x1]
    %537 = vset.pattern.permute.xlu0 0
    %538 = vperm.xlu0 %537, %v535
    %v539 = vpop.permute.xlu0 %538
    %v541 = vlaneseq
    %v542 = vshrl.u32 %v541, 7
    %v543 = vsub.s32 0, %v542
    %v544 = vrot.slane %v539, %v543
    %545 = vmatprep.subr.bf16.mxu0 0
    %546 = vmatpush1.bf16.xpose.msra.mxu0 %v534
    %547 = vmatprep.subr.bf16.mxu0 0
    %548 = vmatpush1.bf16.xpose.msra.mxu0 0
    %549 = vmatprep.subr.bf16.mxu0 0
    %550 = vmatpush1.bf16.xpose.msra.mxu0 0
    %551 = vmatprep.subr.bf16.mxu0 0
    %552 = vmatpush1.bf16.xpose.msra.mxu0 0
    %553 = vmatprep.subr.bf16.mxu0 0
    %554 = vmatpush1.bf16.xpose.msra.mxu0 0
    %555 = vmatprep.subr.bf16.mxu0 0
    %556 = vmatpush1.bf16.xpose.msra.mxu0 0
    %557 = vmatprep.subr.bf16.mxu0 0
    %558 = vmatpush1.bf16.xpose.msra.mxu0 0
    %559 = vmatprep.subr.bf16.mxu0 0
    %560 = vmatpush1.bf16.xpose.msra.mxu0 0
    %561 = vmatprep.subr.bf16.mxu0 0
    %562 = vmatpush1.bf16.xpose.msra.mxu0 0
    %563 = vmatprep.subr.bf16.mxu0 0
    %564 = vmatpush1.bf16.xpose.msra.mxu0 0
    %565 = vmatprep.subr.bf16.mxu0 0
    %566 = vmatpush1.bf16.xpose.msra.mxu0 0
    %567 = vmatprep.subr.bf16.mxu0 0
    %568 = vmatpush1.bf16.xpose.msra.mxu0 0
    %569 = vmatprep.subr.bf16.mxu0 0
    %570 = vmatpush1.bf16.xpose.msra.mxu0 0
    %571 = vmatprep.subr.bf16.mxu0 0
    %572 = vmatpush1.bf16.xpose.msra.mxu0 0
    %573 = vmatprep.subr.bf16.mxu0 0
    %574 = vmatpush1.bf16.xpose.msra.mxu0 0
    %575 = vmatprep.subr.bf16.mxu0 0
    %576 = vmatpush1.bf16.xpose.msra.mxu0 0
    %577 = vmatprep.mubr.bf16.mxu0 0
    %578 = vmatmul.mubr.bf16.gmra.mrb[0].mxu0 %v533
    %v579 = vpop.f32.mrb[0].mxu0
    %v580 = vadd.f32 %v544, %v579
    %v581 = vpop.f32.mrb[0].mxu0
    %v582 = vpop.f32.mrb[0].mxu0
    %v583 = vpop.f32.mrb[0].mxu0
    %584 = vdwg.mxu0
    %vm585 = vcmask 57344
    %586 = vst.msk [vmem:[#allocation9] sm:$0x1] %vm585, %v580
    // Predicated region
    $region42: #{tpu_custom_call.1} parent=1 // pred_check
      _
    $region43: #{tpu_custom_call.1} parent=1 // pred_check_branch
      %588 = sbr.rel (0) target = $region45
    $region44: #{tpu_custom_call.1} parent=1 // pred_region
      %s590 = ssub.s32 16, 16
      %591 = vsyncadd [#allocation5], %s590
      %s593 = sshll.u32 [#allocation9], 4
      %s594 = int_to_ptr.vmem [resolvable:$true] %s593
      %596 = dma.vmem_to_hbm [thread:$0]  %s594, 16, %s7, [#allocation5]
    $region45: #{tpu_custom_call.1} parent=1 // pred_fallthru
      _
    // Predicated region
    $region46: #{tpu_custom_call.1} parent=1 // pred_check
      _
    $region47: #{tpu_custom_call.1} parent=1 // pred_check_branch
      %598 = sbr.rel (0) target = $region49
    $region48: #{tpu_custom_call.1} parent=1 // pred_region
      %599 = dma.done [#allocation5], 16
    $region49: #{tpu_custom_call.1} parent=1 // pred_fallthru
      _
    %600 = vsyncpa [#allocation4], 1
    %601 = vsyncpa [#allocation7], 1
    %602 = vsyncpa [#allocation5], 1

</llo_original>
